<compile_context>
chip_gen: v5e
topology: v5e:2x2
jax: 0.10.0
libtpu: 0.0.40
codegen_flags: <defaults>
</compile_context>

<pallas_src>
import math

import jax
import jax.numpy as jnp
from jax.experimental import pallas as pl
from jax.experimental.pallas import tpu as pltpu

# Small, forward-consistent hyperparameters (module defaults are 512/8/6/2048).
D_MODEL = 32
NHEAD = 4
NUM_LAYERS = 2
DIM_FF = 64
HEAD_DIM = D_MODEL // NHEAD
LN_EPS = 1e-5

# Rows of the packed (L, 6, D) per-layer vector-parameter array.
ROW_BO, ROW_LN1W, ROW_LN1B, ROW_B2, ROW_LN2W, ROW_LN2B = range(6)


def _layer_norm(y, w, b):
    """f32 LayerNorm (biased variance, eps inside rsqrt) - torch defaults."""
    mu = jnp.mean(y, axis=-1, keepdims=True)
    var = jnp.mean(jnp.square(y - mu), axis=-1, keepdims=True)
    return (y - mu) * jax.lax.rsqrt(var + LN_EPS) * w + b


def _ecg_encoder_kernel(x_ref, cls_ref, hmask_ref,
                        wqkv_ref, bqkv_ref, wo_ref, w1_ref, b1_ref, w2_ref,
                        vecd_ref, out_ref, x0_s, x1_s):
    """One encoder layer per grid step along axis 1; activations carried in scratch."""
    l = pl.program_id(1)
    D = D_MODEL
    scale = 1.0 / math.sqrt(HEAD_DIM)

    # ---- initialise the carried hidden state at the first layer --------------
    @pl.when(l == 0)
    def _():
        x0_s[...] = jnp.broadcast_to(cls_ref[...], x0_s.shape)   # CLS position
        x1_s[...] = x_ref[...]                                   # data-token position

    x0 = x0_s[...]                      # (Bb, D) f32
    x1 = x1_s[...]                      # (Bb, D) f32

    # ---- this layer's weights (bf16 matrices, f32 vectors) -------------------
    wqkv = wqkv_ref[0]                  # (D, 3D) bf16
    bqkv = bqkv_ref[0]                  # (1, 3D) f32
    wo = wo_ref[0]                      # (D, D)  bf16
    w1 = w1_ref[0]                      # (D, FF) bf16
    b1 = b1_ref[0]                      # (1, FF) f32
    w2 = w2_ref[0]                      # (FF, D) bf16
    vec = vecd_ref[0]                   # (6, D)  f32
    bo = vec[ROW_BO:ROW_BO + 1]
    ln1w = vec[ROW_LN1W:ROW_LN1W + 1]
    ln1b = vec[ROW_LN1B:ROW_LN1B + 1]
    b2 = vec[ROW_B2:ROW_B2 + 1]
    ln2w = vec[ROW_LN2W:ROW_LN2W + 1]
    ln2b = vec[ROW_LN2B:ROW_LN2B + 1]

    # ---- fused QKV projection: one lane-dense matmul per token position ------
    qkv0 = jnp.dot(x0.astype(jnp.bfloat16), wqkv,
                   preferred_element_type=jnp.float32) + bqkv
    qkv1 = jnp.dot(x1.astype(jnp.bfloat16), wqkv,
                   preferred_element_type=jnp.float32) + bqkv
    q0, k0, v0 = qkv0[:, :D], qkv0[:, D:2 * D], qkv0[:, 2 * D:]
    q1, k1, v1 = qkv1[:, :D], qkv1[:, D:2 * D], qkv1[:, 2 * D:]

    # ---- S=2 multi-head attention ---------------------------------------------
    # Per-head score difference s_q0 - s_q1 reduced over head lanes AND broadcast
    # back to those lanes by a single matmul with the constant block-diagonal
    # head mask; softmax over 2 keys == sigmoid (EUP).
    kdiff = k0 - k1
    vdiff = v0 - v1
    hmask = hmask_ref[...]                                            # (D, D) f32
    d0 = jnp.dot(q0 * kdiff, hmask, preferred_element_type=jnp.float32)
    d1 = jnp.dot(q1 * kdiff, hmask, preferred_element_type=jnp.float32)
    p0 = jax.nn.sigmoid(scale * d0)     # P(key 0), already replicated across head lanes
    p1 = jax.nn.sigmoid(scale * d1)
    o0 = v1 + p0 * vdiff                # heads remain concatenated along lanes
    o1 = v1 + p1 * vdiff

    attn0 = jnp.dot(o0.astype(jnp.bfloat16), wo,
                    preferred_element_type=jnp.float32) + bo
    attn1 = jnp.dot(o1.astype(jnp.bfloat16), wo,
                    preferred_element_type=jnp.float32) + bo

    # ---- residual + LayerNorm1 (post-norm) -----------------------------------
    y0 = _layer_norm(x0 + attn0, ln1w, ln1b)
    y1 = _layer_norm(x1 + attn1, ln1w, ln1b)

    # ---- feed-forward (Linear -> ReLU -> Linear); dropout = identity ---------
    h0 = jnp.maximum(jnp.dot(y0.astype(jnp.bfloat16), w1,
                             preferred_element_type=jnp.float32) + b1, 0.0)
    h1 = jnp.maximum(jnp.dot(y1.astype(jnp.bfloat16), w1,
                             preferred_element_type=jnp.float32) + b1, 0.0)
    f0 = jnp.dot(h0.astype(jnp.bfloat16), w2,
                 preferred_element_type=jnp.float32) + b2
    f1 = jnp.dot(h1.astype(jnp.bfloat16), w2,
                 preferred_element_type=jnp.float32) + b2

    # ---- residual + LayerNorm2 -------------------------------------------------
    n0 = _layer_norm(y0 + f0, ln2w, ln2b)
    n1 = _layer_norm(y1 + f1, ln2w, ln2b)

    x0_s[...] = n0
    x1_s[...] = n1

    # ---- CLS output, stored directly (no gather) after the last layer ---------
    @pl.when(l == pl.num_programs(1) - 1)
    def _():
        out_ref[...] = n0.astype(out_ref.dtype)


def ecg_encoder_forward(x, params, *, batch_block=None):
    """x: (B, d_model) f32 -> (B, d_model) f32 (CLS-token output)."""
    B, D = x.shape
    assert D == D_MODEL
    if batch_block is None:
        # For large B on v7x pass batch_block=B//2 so both TensorCores get work.
        batch_block = B
    assert B % batch_block == 0
    grid = (B // batch_block, NUM_LAYERS)   # layer (carried) axis last

    def per_layer_spec(arr):
        nd = arr.ndim
        return pl.BlockSpec((1,) + arr.shape[1:],
                            lambda b, l, _nd=nd: (l,) + (0,) * (_nd - 1))

    in_specs = [
        pl.BlockSpec((batch_block, D), lambda b, l: (b, 0)),          # x
        pl.BlockSpec((1, D), lambda b, l: (0, 0)),                    # cls (resident)
        pl.BlockSpec((D, D), lambda b, l: (0, 0)),                    # head mask (resident)
        per_layer_spec(params['wqkv']),
        per_layer_spec(params['bqkv']),
        per_layer_spec(params['wo']),
        per_layer_spec(params['w1']),
        per_layer_spec(params['b1']),
        per_layer_spec(params['w2']),
        per_layer_spec(params['vecd']),
    ]
    out_spec = pl.BlockSpec((batch_block, D), lambda b, l: (b, 0))

    return pl.pallas_call(
        _ecg_encoder_kernel,
        out_shape=jax.ShapeDtypeStruct((B, D), jnp.float32),
        grid_spec=pltpu.PrefetchScalarGridSpec(
            num_scalar_prefetch=0,
            grid=grid,
            in_specs=in_specs,
            out_specs=out_spec,
            scratch_shapes=[pltpu.VMEM((batch_block, D), jnp.float32),
                            pltpu.VMEM((batch_block, D), jnp.float32)],
        ),
        compiler_params=pltpu.CompilerParams(
            dimension_semantics=("parallel", "arbitrary"),
            # ~2 layers of bf16 weights double-buffered -> well under 32 MiB even at
            # module-default sizes (and v5e's 16 MiB default is too small, so keep explicit).
            vmem_limit_bytes=32 * 1024 * 1024,
        ),
    )(x, params['cls_token'], params['head_mask'],
      params['wqkv'], params['bqkv'], params['wo'],
      params['w1'], params['b1'], params['w2'], params['vecd'])


def init_params(key):
    """Deterministic init mirroring the PyTorch module's xavier_uniform_ fans.

    Weights are stored pre-transposed (x @ W + b), matrices in bf16:
      wqkv: (L, D, 3D) bf16      wo: (L, D, D) bf16
      w1:   (L, D, FF) bf16      w2: (L, FF, D) bf16
      bqkv: (L, 1, 3D) f32       b1: (L, 1, FF) f32
      vecd: (L, 6, D)  f32 packed [bo, ln1_w, ln1_b, b2, ln2_w, ln2_b]
      head_mask: (D, D) f32 block-diagonal ones (head membership)
    """
    D, FF, L, hd = D_MODEL, DIM_FF, NUM_LAYERS, HEAD_DIM
    ks = jax.random.split(key, 5)

    def xavier(k, shape, fan_in, fan_out):
        limit = math.sqrt(6.0 / (fan_in + fan_out))
        return jax.random.uniform(k, shape, jnp.float32, -limit, limit)

    # cls_token (torch (1,1,D): fan_in = fan_out = D); stored flattened to (1, D)
    cls_token = xavier(ks[0], (1, D), D, D)

    # MHA in_proj_weight (3D, D): fan_in=D, fan_out=3D -> stored transposed (D, 3D)
    in_proj = xavier(ks[1], (L, 3 * D, D), D, 3 * D)
    wqkv = jnp.swapaxes(in_proj, -1, -2).astype(jnp.bfloat16)
    bqkv = jnp.zeros((L, 1, 3 * D), jnp.float32)

    # out_proj (D, D)
    wo = jnp.swapaxes(xavier(ks[2], (L, D, D), D, D), -1, -2).astype(jnp.bfloat16)

    # FFN (linear1: (FF, D), linear2: (D, FF))
    w1 = jnp.swapaxes(xavier(ks[3], (L, FF, D), D, FF), -1, -2).astype(jnp.bfloat16)
    w2 = jnp.swapaxes(xavier(ks[4], (L, D, FF), FF, D), -1, -2).astype(jnp.bfloat16)
    b1 = jnp.zeros((L, 1, FF), jnp.float32)

    vecd = jnp.zeros((L, 6, D), jnp.float32)
    vecd = vecd.at[:, ROW_LN1W].set(1.0).at[:, ROW_LN2W].set(1.0)

    # Block-diagonal head-membership mask used by the attention score reduce+broadcast.
    r = jnp.arange(D) // hd
    head_mask = (r[:, None] == r[None, :]).astype(jnp.float32)

    # TODO(synk): if weights are ever quantized below bf16, use fp8 on v7x (its MXU has
    #             no int8 path); int8 storage only pays off on v5e/v6e.
    return {
        'cls_token': cls_token, 'head_mask': head_mask,
        'wqkv': wqkv, 'bqkv': bqkv, 'wo': wo,
        'w1': w1, 'b1': b1, 'w2': w2, 'vecd': vecd,
    }


def _reference_forward(x, params):
    """Pure-JAX f32 reference (standard softmax/per-head path) for a sanity check."""
    D, H, hd, L = D_MODEL, NHEAD, HEAD_DIM, NUM_LAYERS
    B = x.shape[0]
    scale = 1.0 / math.sqrt(hd)
    cls = jnp.broadcast_to(params['cls_token'], (B, D))
    seq = jnp.stack([cls, x], axis=1)                                 # (B, 2, D)
    for l in range(L):
        wqkv = params['wqkv'][l].astype(jnp.float32)
        qkv = seq @ wqkv + params['bqkv'][l]
        q, k, v = qkv[..., :D], qkv[..., D:2 * D], qkv[..., 2 * D:]

        def heads(t):
            return t.reshape(B, 2, H, hd).transpose(0, 2, 1, 3)       # (B, H, 2, hd)

        qh, kh, vh = heads(q), heads(k), heads(v)
        s = jnp.einsum('bhqe,bhke->bhqk', qh, kh) * scale
        p = jax.nn.softmax(s, axis=-1)
        oh = jnp.einsum('bhqk,bhke->bhqe', p, vh)
        o = oh.transpose(0, 2, 1, 3).reshape(B, 2, D)

        vec = params['vecd'][l]
        attn = o @ params['wo'][l].astype(jnp.float32) + vec[ROW_BO]
        y = _layer_norm(seq + attn, vec[ROW_LN1W], vec[ROW_LN1B])
        h = jnp.maximum(y @ params['w1'][l].astype(jnp.float32) + params['b1'][l], 0.0)
        f = h @ params['w2'][l].astype(jnp.float32) + vec[ROW_B2]
        seq = _layer_norm(y + f, vec[ROW_LN2W], vec[ROW_LN2B])
    return seq[:, 0, :]


if __name__ == "__main__":
    key = jax.random.PRNGKey(0)
    pkey, xkey = jax.random.split(key)
    params = init_params(pkey)

    B = 2
    x = jax.random.normal(xkey, (B, D_MODEL), jnp.float32)   # module input (B, d_model)

    out = jax.block_until_ready(ecg_encoder_forward(x, params))
    assert out.shape == (B, D_MODEL) and out.dtype == jnp.float32
    assert bool(jnp.all(jnp.isfinite(out)))

    # Loose check vs. an f32 reference (kernel uses bf16 matmul operands).
    ref = _reference_forward(x, params)
    assert float(jnp.max(jnp.abs(out - ref))) < 0.1

    print("KERNEL_OK")
</pallas_src>

<mosaic_0001>
module attributes {stable_mosaic.version = 11 : i64} {
  func.func @_ecg_encoder_kernel(%arg0: i32, %arg1: i32, %arg2: memref<2x32xf32, #tpu.memory_space<vmem>>, %arg3: memref<1x32xf32, #tpu.memory_space<vmem>>, %arg4: memref<32x32xf32, #tpu.memory_space<vmem>>, %arg5: memref<1x32x96xbf16, #tpu.memory_space<vmem>>, %arg6: memref<1x1x96xf32, #tpu.memory_space<vmem>>, %arg7: memref<1x32x32xbf16, #tpu.memory_space<vmem>>, %arg8: memref<1x32x64xbf16, #tpu.memory_space<vmem>>, %arg9: memref<1x1x64xf32, #tpu.memory_space<vmem>>, %arg10: memref<1x64x32xbf16, #tpu.memory_space<vmem>>, %arg11: memref<1x6x32xf32, #tpu.memory_space<vmem>>, %arg12: memref<2x32xf32, #tpu.memory_space<vmem>>, %arg13: memref<2x32xf32, #tpu.memory_space<vmem>>, %arg14: memref<2x32xf32, #tpu.memory_space<vmem>>) attributes {dimension_semantics = [#tpu.dimension_semantics<parallel>, #tpu.dimension_semantics<arbitrary>], iteration_bounds = array<i64: 1, 2>, scalar_prefetch = 0 : i64, scratch_operands = 2 : i64, tpu.core_type = #tpu.core_type<tc>, window_params = [{transform_indices = @transform_0, window_bounds = array<i64: 2, 32>}, {pipeline_mode = #tpu.pipeline_mode<synchronous>, transform_indices = @transform_1, window_bounds = array<i64: 1, 32>}, {pipeline_mode = #tpu.pipeline_mode<synchronous>, transform_indices = @transform_2, window_bounds = array<i64: 32, 32>}, {transform_indices = @transform_3, window_bounds = array<i64: 1, 32, 96>}, {transform_indices = @transform_4, window_bounds = array<i64: 1, 1, 96>}, {transform_indices = @transform_5, window_bounds = array<i64: 1, 32, 32>}, {transform_indices = @transform_6, window_bounds = array<i64: 1, 32, 64>}, {transform_indices = @transform_7, window_bounds = array<i64: 1, 1, 64>}, {transform_indices = @transform_8, window_bounds = array<i64: 1, 64, 32>}, {transform_indices = @transform_9, window_bounds = array<i64: 1, 6, 32>}, {transform_indices = @transform_10, window_bounds = array<i64: 2, 32>}]} {
    %c0_i32 = arith.constant 0 : i32
    %0 = arith.cmpi eq, %arg1, %c0_i32 : i32
    %1 = arith.extui %0 : i1 to i32
    %c0_i32_0 = arith.constant 0 : i32
    %2 = arith.cmpi ne, %1, %c0_i32_0 : i32
    scf.if %2 {
      %c0_67 = arith.constant 0 : index
      %c0_68 = arith.constant 0 : index
      %189 = vector.load %arg3[%c0_67, %c0_68] : memref<1x32xf32, #tpu.memory_space<vmem>>, vector<1x32xf32>
      %190 = vector.shape_cast %189 : vector<1x32xf32> to vector<1x32xf32>
      %191 = vector.broadcast %190 : vector<1x32xf32> to vector<2x32xf32>
      %c0_69 = arith.constant 0 : index
      %c0_70 = arith.constant 0 : index
      %192 = vector.load %arg13[%c0_69, %c0_70] : memref<2x32xf32, #tpu.memory_space<vmem>>, vector<2x32xf32>
      tpu.vector_store %arg13[%c0_69, %c0_70], %191 {strides = array<i32>} : memref<2x32xf32, #tpu.memory_space<vmem>>, vector<2x32xf32>,
      %c0_71 = arith.constant 0 : index
      %c0_72 = arith.constant 0 : index
      %193 = vector.load %arg2[%c0_71, %c0_72] : memref<2x32xf32, #tpu.memory_space<vmem>>, vector<2x32xf32>
      %c0_73 = arith.constant 0 : index
      %c0_74 = arith.constant 0 : index
      %194 = vector.load %arg14[%c0_73, %c0_74] : memref<2x32xf32, #tpu.memory_space<vmem>>, vector<2x32xf32>
      tpu.vector_store %arg14[%c0_73, %c0_74], %193 {strides = array<i32>} : memref<2x32xf32, #tpu.memory_space<vmem>>, vector<2x32xf32>,
    } else {
    }
    %c0 = arith.constant 0 : index
    %c0_1 = arith.constant 0 : index
    %3 = vector.load %arg13[%c0, %c0_1] : memref<2x32xf32, #tpu.memory_space<vmem>>, vector<2x32xf32>
    %c0_2 = arith.constant 0 : index
    %c0_3 = arith.constant 0 : index
    %4 = vector.load %arg14[%c0_2, %c0_3] : memref<2x32xf32, #tpu.memory_space<vmem>>, vector<2x32xf32>
    %c0_4 = arith.constant 0 : index
    %c0_5 = arith.constant 0 : index
    %c0_6 = arith.constant 0 : index
    %5 = vector.load %arg5[%c0_4, %c0_5, %c0_6] : memref<1x32x96xbf16, #tpu.memory_space<vmem>>, vector<1x32x96xbf16>
    %6 = vector.shape_cast %5 : vector<1x32x96xbf16> to vector<32x96xbf16>
    %c0_7 = arith.constant 0 : index
    %c0_8 = arith.constant 0 : index
    %c0_9 = arith.constant 0 : index
    %7 = vector.load %arg6[%c0_7, %c0_8, %c0_9] : memref<1x1x96xf32, #tpu.memory_space<vmem>>, vector<1x1x96xf32>
    %8 = vector.shape_cast %7 : vector<1x1x96xf32> to vector<1x96xf32>
    %c0_10 = arith.constant 0 : index
    %c0_11 = arith.constant 0 : index
    %c0_12 = arith.constant 0 : index
    %9 = vector.load %arg7[%c0_10, %c0_11, %c0_12] : memref<1x32x32xbf16, #tpu.memory_space<vmem>>, vector<1x32x32xbf16>
    %10 = vector.shape_cast %9 : vector<1x32x32xbf16> to vector<32x32xbf16>
    %c0_13 = arith.constant 0 : index
    %c0_14 = arith.constant 0 : index
    %c0_15 = arith.constant 0 : index
    %11 = vector.load %arg8[%c0_13, %c0_14, %c0_15] : memref<1x32x64xbf16, #tpu.memory_space<vmem>>, vector<1x32x64xbf16>
    %12 = vector.shape_cast %11 : vector<1x32x64xbf16> to vector<32x64xbf16>
    %c0_16 = arith.constant 0 : index
    %c0_17 = arith.constant 0 : index
    %c0_18 = arith.constant 0 : index
    %13 = vector.load %arg9[%c0_16, %c0_17, %c0_18] : memref<1x1x64xf32, #tpu.memory_space<vmem>>, vector<1x1x64xf32>
    %14 = vector.shape_cast %13 : vector<1x1x64xf32> to vector<1x64xf32>
    %c0_19 = arith.constant 0 : index
    %c0_20 = arith.constant 0 : index
    %c0_21 = arith.constant 0 : index
    %15 = vector.load %arg10[%c0_19, %c0_20, %c0_21] : memref<1x64x32xbf16, #tpu.memory_space<vmem>>, vector<1x64x32xbf16>
    %16 = vector.shape_cast %15 : vector<1x64x32xbf16> to vector<64x32xbf16>
    %c0_22 = arith.constant 0 : index
    %c0_23 = arith.constant 0 : index
    %c0_24 = arith.constant 0 : index
    %17 = vector.load %arg11[%c0_22, %c0_23, %c0_24] : memref<1x6x32xf32, #tpu.memory_space<vmem>>, vector<1x6x32xf32>
    %18 = vector.shape_cast %17 : vector<1x6x32xf32> to vector<6x32xf32>
    %19 = vector.extract_strided_slice %18 {offsets = [0, 0], sizes = [1, 32], strides = [1, 1]} : vector<6x32xf32> to vector<1x32xf32>
    %20 = vector.extract_strided_slice %18 {offsets = [1, 0], sizes = [1, 32], strides = [1, 1]} : vector<6x32xf32> to vector<1x32xf32>
    %21 = vector.extract_strided_slice %18 {offsets = [2, 0], sizes = [1, 32], strides = [1, 1]} : vector<6x32xf32> to vector<1x32xf32>
    %22 = vector.extract_strided_slice %18 {offsets = [3, 0], sizes = [1, 32], strides = [1, 1]} : vector<6x32xf32> to vector<1x32xf32>
    %23 = vector.extract_strided_slice %18 {offsets = [4, 0], sizes = [1, 32], strides = [1, 1]} : vector<6x32xf32> to vector<1x32xf32>
    %24 = vector.extract_strided_slice %18 {offsets = [5, 0], sizes = [1, 32], strides = [1, 1]} : vector<6x32xf32> to vector<1x32xf32>
    %25 = arith.truncf %3 : vector<2x32xf32> to vector<2x32xbf16>
    %cst = arith.constant dense<0.000000e+00> : vector<2x96xf32>
    %26 = tpu.matmul %25, %6, %cst {dimension_numbers = #tpu.dot_dimension_numbers<[1], [0], [0], [1], [0, 0, 1, 1], [], []>} : vector<2x32xbf16>, vector<32x96xbf16>, vector<2x96xf32> -> vector<2x96xf32>
    %27 = vector.broadcast %8 : vector<1x96xf32> to vector<2x96xf32>
    %28 = arith.addf %26, %27 : vector<2x96xf32>
    %29 = arith.truncf %4 : vector<2x32xf32> to vector<2x32xbf16>
    %cst_25 = arith.constant dense<0.000000e+00> : vector<2x96xf32>
    %30 = tpu.matmul %29, %6, %cst_25 {dimension_numbers = #tpu.dot_dimension_numbers<[1], [0], [0], [1], [0, 0, 1, 1], [], []>} : vector<2x32xbf16>, vector<32x96xbf16>, vector<2x96xf32> -> vector<2x96xf32>
    %31 = vector.broadcast %8 : vector<1x96xf32> to vector<2x96xf32>
    %32 = arith.addf %30, %31 : vector<2x96xf32>
    %33 = vector.extract_strided_slice %28 {offsets = [0, 0], sizes = [2, 32], strides = [1, 1]} : vector<2x96xf32> to vector<2x32xf32>
    %34 = vector.extract_strided_slice %28 {offsets = [0, 32], sizes = [2, 32], strides = [1, 1]} : vector<2x96xf32> to vector<2x32xf32>
    %35 = vector.extract_strided_slice %28 {offsets = [0, 64], sizes = [2, 32], strides = [1, 1]} : vector<2x96xf32> to vector<2x32xf32>
    %36 = vector.extract_strided_slice %32 {offsets = [0, 0], sizes = [2, 32], strides = [1, 1]} : vector<2x96xf32> to vector<2x32xf32>
    %37 = vector.extract_strided_slice %32 {offsets = [0, 32], sizes = [2, 32], strides = [1, 1]} : vector<2x96xf32> to vector<2x32xf32>
    %38 = vector.extract_strided_slice %32 {offsets = [0, 64], sizes = [2, 32], strides = [1, 1]} : vector<2x96xf32> to vector<2x32xf32>
    %39 = arith.subf %34, %37 : vector<2x32xf32>
    %40 = arith.subf %35, %38 : vector<2x32xf32>
    %c0_26 = arith.constant 0 : index
    %c0_27 = arith.constant 0 : index
    %41 = vector.load %arg4[%c0_26, %c0_27] : memref<32x32xf32, #tpu.memory_space<vmem>>, vector<32x32xf32>
    %42 = arith.mulf %33, %39 : vector<2x32xf32>
    %cst_28 = arith.constant dense<0.000000e+00> : vector<2x32xf32>
    %43 = tpu.matmul %42, %41, %cst_28 {dimension_numbers = #tpu.dot_dimension_numbers<[1], [0], [0], [1], [0, 0, 1, 1], [], []>} : vector<2x32xf32>, vector<32x32xf32>, vector<2x32xf32> -> vector<2x32xf32>
    %44 = arith.mulf %36, %39 : vector<2x32xf32>
    %cst_29 = arith.constant dense<0.000000e+00> : vector<2x32xf32>
    %45 = tpu.matmul %44, %41, %cst_29 {dimension_numbers = #tpu.dot_dimension_numbers<[1], [0], [0], [1], [0, 0, 1, 1], [], []>} : vector<2x32xf32>, vector<32x32xf32>, vector<2x32xf32> -> vector<2x32xf32>
    %cst_30 = arith.constant 0.353553385 : f32
    %46 = vector.broadcast %cst_30 : f32 to vector<2x32xf32>
    %47 = arith.mulf %46, %43 : vector<2x32xf32>
    %48 = arith.negf %47 : vector<2x32xf32>
    %49 = math.exp %48 : vector<2x32xf32>
    %cst_31 = arith.constant 1.000000e+00 : f32
    %50 = vector.broadcast %cst_31 : f32 to vector<2x32xf32>
    %51 = arith.addf %50, %49 : vector<2x32xf32>
    %52 = arith.divf %50, %51 : vector<2x32xf32>
    %cst_32 = arith.constant 0.353553385 : f32
    %53 = vector.broadcast %cst_32 : f32 to vector<2x32xf32>
    %54 = arith.mulf %53, %45 : vector<2x32xf32>
    %55 = arith.negf %54 : vector<2x32xf32>
    %56 = math.exp %55 : vector<2x32xf32>
    %cst_33 = arith.constant 1.000000e+00 : f32
    %57 = vector.broadcast %cst_33 : f32 to vector<2x32xf32>
    %58 = arith.addf %57, %56 : vector<2x32xf32>
    %59 = arith.divf %57, %58 : vector<2x32xf32>
    %60 = arith.mulf %52, %40 : vector<2x32xf32>
    %61 = arith.addf %38, %60 : vector<2x32xf32>
    %62 = arith.mulf %59, %40 : vector<2x32xf32>
    %63 = arith.addf %38, %62 : vector<2x32xf32>
    %64 = arith.truncf %61 : vector<2x32xf32> to vector<2x32xbf16>
    %cst_34 = arith.constant dense<0.000000e+00> : vector<2x32xf32>
    %65 = tpu.matmul %64, %10, %cst_34 {dimension_numbers = #tpu.dot_dimension_numbers<[1], [0], [0], [1], [0, 0, 1, 1], [], []>} : vector<2x32xbf16>, vector<32x32xbf16>, vector<2x32xf32> -> vector<2x32xf32>
    %66 = vector.broadcast %19 : vector<1x32xf32> to vector<2x32xf32>
    %67 = arith.addf %65, %66 : vector<2x32xf32>
    %68 = arith.truncf %63 : vector<2x32xf32> to vector<2x32xbf16>
    %cst_35 = arith.constant dense<0.000000e+00> : vector<2x32xf32>
    %69 = tpu.matmul %68, %10, %cst_35 {dimension_numbers = #tpu.dot_dimension_numbers<[1], [0], [0], [1], [0, 0, 1, 1], [], []>} : vector<2x32xbf16>, vector<32x32xbf16>, vector<2x32xf32> -> vector<2x32xf32>
    %70 = vector.broadcast %19 : vector<1x32xf32> to vector<2x32xf32>
    %71 = arith.addf %69, %70 : vector<2x32xf32>
    %72 = arith.addf %3, %67 : vector<2x32xf32>
    %cst_36 = arith.constant dense<0.000000e+00> : vector<2xf32>
    %73 = vector.multi_reduction <add>, %72, %cst_36 [1] : vector<2x32xf32> to vector<2xf32>
    %74 = vector.shape_cast %73 : vector<2xf32> to vector<2x1xf32>
    %cst_37 = arith.constant 3.200000e+01 : f32
    %75 = vector.broadcast %cst_37 : f32 to vector<2x1xf32>
    %76 = arith.divf %74, %75 : vector<2x1xf32>
    %77 = vector.broadcast %76 : vector<2x1xf32> to vector<2x32xf32>
    %78 = arith.subf %72, %77 : vector<2x32xf32>
    %79 = arith.mulf %78, %78 : vector<2x32xf32>
    %cst_38 = arith.constant dense<0.000000e+00> : vector<2xf32>
    %80 = vector.multi_reduction <add>, %79, %cst_38 [1] : vector<2x32xf32> to vector<2xf32>
    %81 = vector.shape_cast %80 : vector<2xf32> to vector<2x1xf32>
    %cst_39 = arith.constant 3.200000e+01 : f32
    %82 = vector.broadcast %cst_39 : f32 to vector<2x1xf32>
    %83 = arith.divf %81, %82 : vector<2x1xf32>
    %84 = vector.broadcast %76 : vector<2x1xf32> to vector<2x32xf32>
    %85 = arith.subf %72, %84 : vector<2x32xf32>
    %cst_40 = arith.constant 9.99999974E-6 : f32
    %86 = vector.broadcast %cst_40 : f32 to vector<2x1xf32>
    %87 = arith.addf %83, %86 : vector<2x1xf32>
    %88 = math.rsqrt %87 : vector<2x1xf32>
    %89 = vector.broadcast %88 : vector<2x1xf32> to vector<2x32xf32>
    %90 = arith.mulf %85, %89 : vector<2x32xf32>
    %91 = vector.broadcast %20 : vector<1x32xf32> to vector<2x32xf32>
    %92 = arith.mulf %90, %91 : vector<2x32xf32>
    %93 = vector.broadcast %21 : vector<1x32xf32> to vector<2x32xf32>
    %94 = arith.addf %92, %93 : vector<2x32xf32>
    %95 = arith.addf %4, %71 : vector<2x32xf32>
    %cst_41 = arith.constant dense<0.000000e+00> : vector<2xf32>
    %96 = vector.multi_reduction <add>, %95, %cst_41 [1] : vector<2x32xf32> to vector<2xf32>
    %97 = vector.shape_cast %96 : vector<2xf32> to vector<2x1xf32>
    %cst_42 = arith.constant 3.200000e+01 : f32
    %98 = vector.broadcast %cst_42 : f32 to vector<2x1xf32>
    %99 = arith.divf %97, %98 : vector<2x1xf32>
    %100 = vector.broadcast %99 : vector<2x1xf32> to vector<2x32xf32>
    %101 = arith.subf %95, %100 : vector<2x32xf32>
    %102 = arith.mulf %101, %101 : vector<2x32xf32>
    %cst_43 = arith.constant dense<0.000000e+00> : vector<2xf32>
    %103 = vector.multi_reduction <add>, %102, %cst_43 [1] : vector<2x32xf32> to vector<2xf32>
    %104 = vector.shape_cast %103 : vector<2xf32> to vector<2x1xf32>
    %cst_44 = arith.constant 3.200000e+01 : f32
    %105 = vector.broadcast %cst_44 : f32 to vector<2x1xf32>
    %106 = arith.divf %104, %105 : vector<2x1xf32>
    %107 = vector.broadcast %99 : vector<2x1xf32> to vector<2x32xf32>
    %108 = arith.subf %95, %107 : vector<2x32xf32>
    %cst_45 = arith.constant 9.99999974E-6 : f32
    %109 = vector.broadcast %cst_45 : f32 to vector<2x1xf32>
    %110 = arith.addf %106, %109 : vector<2x1xf32>
    %111 = math.rsqrt %110 : vector<2x1xf32>
    %112 = vector.broadcast %111 : vector<2x1xf32> to vector<2x32xf32>
    %113 = arith.mulf %108, %112 : vector<2x32xf32>
    %114 = vector.broadcast %20 : vector<1x32xf32> to vector<2x32xf32>
    %115 = arith.mulf %113, %114 : vector<2x32xf32>
    %116 = vector.broadcast %21 : vector<1x32xf32> to vector<2x32xf32>
    %117 = arith.addf %115, %116 : vector<2x32xf32>
    %118 = arith.truncf %94 : vector<2x32xf32> to vector<2x32xbf16>
    %cst_46 = arith.constant dense<0.000000e+00> : vector<2x64xf32>
    %119 = tpu.matmul %118, %12, %cst_46 {dimension_numbers = #tpu.dot_dimension_numbers<[1], [0], [0], [1], [0, 0, 1, 1], [], []>} : vector<2x32xbf16>, vector<32x64xbf16>, vector<2x64xf32> -> vector<2x64xf32>
    %120 = vector.broadcast %14 : vector<1x64xf32> to vector<2x64xf32>
    %121 = arith.addf %119, %120 : vector<2x64xf32>
    %cst_47 = arith.constant 0.000000e+00 : f32
    %122 = vector.broadcast %cst_47 : f32 to vector<2x64xf32>
    %123 = arith.maximumf %121, %122 : vector<2x64xf32>
    %124 = arith.truncf %117 : vector<2x32xf32> to vector<2x32xbf16>
    %cst_48 = arith.constant dense<0.000000e+00> : vector<2x64xf32>
    %125 = tpu.matmul %124, %12, %cst_48 {dimension_numbers = #tpu.dot_dimension_numbers<[1], [0], [0], [1], [0, 0, 1, 1], [], []>} : vector<2x32xbf16>, vector<32x64xbf16>, vector<2x64xf32> -> vector<2x64xf32>
    %126 = vector.broadcast %14 : vector<1x64xf32> to vector<2x64xf32>
    %127 = arith.addf %125, %126 : vector<2x64xf32>
    %cst_49 = arith.constant 0.000000e+00 : f32
    %128 = vector.broadcast %cst_49 : f32 to vector<2x64xf32>
    %129 = arith.maximumf %127, %128 : vector<2x64xf32>
    %130 = arith.truncf %123 : vector<2x64xf32> to vector<2x64xbf16>
    %cst_50 = arith.constant dense<0.000000e+00> : vector<2x32xf32>
    %131 = tpu.matmul %130, %16, %cst_50 {dimension_numbers = #tpu.dot_dimension_numbers<[1], [0], [0], [1], [0, 0, 1, 1], [], []>} : vector<2x64xbf16>, vector<64x32xbf16>, vector<2x32xf32> -> vector<2x32xf32>
    %132 = vector.broadcast %22 : vector<1x32xf32> to vector<2x32xf32>
    %133 = arith.addf %131, %132 : vector<2x32xf32>
    %134 = arith.truncf %129 : vector<2x64xf32> to vector<2x64xbf16>
    %cst_51 = arith.constant dense<0.000000e+00> : vector<2x32xf32>
    %135 = tpu.matmul %134, %16, %cst_51 {dimension_numbers = #tpu.dot_dimension_numbers<[1], [0], [0], [1], [0, 0, 1, 1], [], []>} : vector<2x64xbf16>, vector<64x32xbf16>, vector<2x32xf32> -> vector<2x32xf32>
    %136 = vector.broadcast %22 : vector<1x32xf32> to vector<2x32xf32>
    %137 = arith.addf %135, %136 : vector<2x32xf32>
    %138 = arith.addf %94, %133 : vector<2x32xf32>
    %cst_52 = arith.constant dense<0.000000e+00> : vector<2xf32>
    %139 = vector.multi_reduction <add>, %138, %cst_52 [1] : vector<2x32xf32> to vector<2xf32>
    %140 = vector.shape_cast %139 : vector<2xf32> to vector<2x1xf32>
    %cst_53 = arith.constant 3.200000e+01 : f32
    %141 = vector.broadcast %cst_53 : f32 to vector<2x1xf32>
    %142 = arith.divf %140, %141 : vector<2x1xf32>
    %143 = vector.broadcast %142 : vector<2x1xf32> to vector<2x32xf32>
    %144 = arith.subf %138, %143 : vector<2x32xf32>
    %145 = arith.mulf %144, %144 : vector<2x32xf32>
    %cst_54 = arith.constant dense<0.000000e+00> : vector<2xf32>
    %146 = vector.multi_reduction <add>, %145, %cst_54 [1] : vector<2x32xf32> to vector<2xf32>
    %147 = vector.shape_cast %146 : vector<2xf32> to vector<2x1xf32>
    %cst_55 = arith.constant 3.200000e+01 : f32
    %148 = vector.broadcast %cst_55 : f32 to vector<2x1xf32>
    %149 = arith.divf %147, %148 : vector<2x1xf32>
    %150 = vector.broadcast %142 : vector<2x1xf32> to vector<2x32xf32>
    %151 = arith.subf %138, %150 : vector<2x32xf32>
    %cst_56 = arith.constant 9.99999974E-6 : f32
    %152 = vector.broadcast %cst_56 : f32 to vector<2x1xf32>
    %153 = arith.addf %149, %152 : vector<2x1xf32>
    %154 = math.rsqrt %153 : vector<2x1xf32>
    %155 = vector.broadcast %154 : vector<2x1xf32> to vector<2x32xf32>
    %156 = arith.mulf %151, %155 : vector<2x32xf32>
    %157 = vector.broadcast %23 : vector<1x32xf32> to vector<2x32xf32>
    %158 = arith.mulf %156, %157 : vector<2x32xf32>
    %159 = vector.broadcast %24 : vector<1x32xf32> to vector<2x32xf32>
    %160 = arith.addf %158, %159 : vector<2x32xf32>
    %161 = arith.addf %117, %137 : vector<2x32xf32>
    %cst_57 = arith.constant dense<0.000000e+00> : vector<2xf32>
    %162 = vector.multi_reduction <add>, %161, %cst_57 [1] : vector<2x32xf32> to vector<2xf32>
    %163 = vector.shape_cast %162 : vector<2xf32> to vector<2x1xf32>
    %cst_58 = arith.constant 3.200000e+01 : f32
    %164 = vector.broadcast %cst_58 : f32 to vector<2x1xf32>
    %165 = arith.divf %163, %164 : vector<2x1xf32>
    %166 = vector.broadcast %165 : vector<2x1xf32> to vector<2x32xf32>
    %167 = arith.subf %161, %166 : vector<2x32xf32>
    %168 = arith.mulf %167, %167 : vector<2x32xf32>
    %cst_59 = arith.constant dense<0.000000e+00> : vector<2xf32>
    %169 = vector.multi_reduction <add>, %168, %cst_59 [1] : vector<2x32xf32> to vector<2xf32>
    %170 = vector.shape_cast %169 : vector<2xf32> to vector<2x1xf32>
    %cst_60 = arith.constant 3.200000e+01 : f32
    %171 = vector.broadcast %cst_60 : f32 to vector<2x1xf32>
    %172 = arith.divf %170, %171 : vector<2x1xf32>
    %173 = vector.broadcast %165 : vector<2x1xf32> to vector<2x32xf32>
    %174 = arith.subf %161, %173 : vector<2x32xf32>
    %cst_61 = arith.constant 9.99999974E-6 : f32
    %175 = vector.broadcast %cst_61 : f32 to vector<2x1xf32>
    %176 = arith.addf %172, %175 : vector<2x1xf32>
    %177 = math.rsqrt %176 : vector<2x1xf32>
    %178 = vector.broadcast %177 : vector<2x1xf32> to vector<2x32xf32>
    %179 = arith.mulf %174, %178 : vector<2x32xf32>
    %180 = vector.broadcast %23 : vector<1x32xf32> to vector<2x32xf32>
    %181 = arith.mulf %179, %180 : vector<2x32xf32>
    %182 = vector.broadcast %24 : vector<1x32xf32> to vector<2x32xf32>
    %183 = arith.addf %181, %182 : vector<2x32xf32>
    %c0_62 = arith.constant 0 : index
    %c0_63 = arith.constant 0 : index
    %184 = vector.load %arg13[%c0_62, %c0_63] : memref<2x32xf32, #tpu.memory_space<vmem>>, vector<2x32xf32>
    tpu.vector_store %arg13[%c0_62, %c0_63], %160 {strides = array<i32>} : memref<2x32xf32, #tpu.memory_space<vmem>>, vector<2x32xf32>,
    %c0_64 = arith.constant 0 : index
    %c0_65 = arith.constant 0 : index
    %185 = vector.load %arg14[%c0_64, %c0_65] : memref<2x32xf32, #tpu.memory_space<vmem>>, vector<2x32xf32>
    tpu.vector_store %arg14[%c0_64, %c0_65], %183 {strides = array<i32>} : memref<2x32xf32, #tpu.memory_space<vmem>>, vector<2x32xf32>,
    %c1_i32 = arith.constant 1 : i32
    %186 = arith.cmpi eq, %arg1, %c1_i32 : i32
    %187 = arith.extui %186 : i1 to i32
    %c0_i32_66 = arith.constant 0 : i32
    %188 = arith.cmpi ne, %187, %c0_i32_66 : i32
    scf.if %188 {
      %c0_67 = arith.constant 0 : index
      %c0_68 = arith.constant 0 : index
      %189 = vector.load %arg12[%c0_67, %c0_68] : memref<2x32xf32, #tpu.memory_space<vmem>>, vector<2x32xf32>
      tpu.vector_store %arg12[%c0_67, %c0_68], %160 {strides = array<i32>} : memref<2x32xf32, #tpu.memory_space<vmem>>, vector<2x32xf32>,
    } else {
    }
    return
  }
  func.func @transform_0(%arg0: i32, %arg1: i32) -> (i32, i32) {
    %c0_i32 = arith.constant 0 : i32
    %c0_i32_0 = arith.constant 0 : i32
    return %arg0, %c0_i32 : i32, i32
  }
  func.func @transform_1(%arg0: i32, %arg1: i32) -> (i32, i32) {
    %c0_i32 = arith.constant 0 : i32
    %c0_i32_0 = arith.constant 0 : i32
    %c0_i32_1 = arith.constant 0 : i32
    return %c0_i32, %c0_i32_0 : i32, i32
  }
  func.func @transform_2(%arg0: i32, %arg1: i32) -> (i32, i32) {
    %c0_i32 = arith.constant 0 : i32
    %c0_i32_0 = arith.constant 0 : i32
    %c0_i32_1 = arith.constant 0 : i32
    return %c0_i32, %c0_i32_0 : i32, i32
  }
  func.func @transform_3(%arg0: i32, %arg1: i32) -> (i32, i32, i32) {
    %c0_i32 = arith.constant 0 : i32
    %c0_i32_0 = arith.constant 0 : i32
    %c0_i32_1 = arith.constant 0 : i32
    return %arg1, %c0_i32, %c0_i32_0 : i32, i32, i32
  }
  func.func @transform_4(%arg0: i32, %arg1: i32) -> (i32, i32, i32) {
    %c0_i32 = arith.constant 0 : i32
    %c0_i32_0 = arith.constant 0 : i32
    %c0_i32_1 = arith.constant 0 : i32
    return %arg1, %c0_i32, %c0_i32_0 : i32, i32, i32
  }
  func.func @transform_5(%arg0: i32, %arg1: i32) -> (i32, i32, i32) {
    %c0_i32 = arith.constant 0 : i32
    %c0_i32_0 = arith.constant 0 : i32
    %c0_i32_1 = arith.constant 0 : i32
    return %arg1, %c0_i32, %c0_i32_0 : i32, i32, i32
  }
  func.func @transform_6(%arg0: i32, %arg1: i32) -> (i32, i32, i32) {
    %c0_i32 = arith.constant 0 : i32
    %c0_i32_0 = arith.constant 0 : i32
    %c0_i32_1 = arith.constant 0 : i32
    return %arg1, %c0_i32, %c0_i32_0 : i32, i32, i32
  }
  func.func @transform_7(%arg0: i32, %arg1: i32) -> (i32, i32, i32) {
    %c0_i32 = arith.constant 0 : i32
    %c0_i32_0 = arith.constant 0 : i32
    %c0_i32_1 = arith.constant 0 : i32
    return %arg1, %c0_i32, %c0_i32_0 : i32, i32, i32
  }
  func.func @transform_8(%arg0: i32, %arg1: i32) -> (i32, i32, i32) {
    %c0_i32 = arith.constant 0 : i32
    %c0_i32_0 = arith.constant 0 : i32
    %c0_i32_1 = arith.constant 0 : i32
    return %arg1, %c0_i32, %c0_i32_0 : i32, i32, i32
  }
  func.func @transform_9(%arg0: i32, %arg1: i32) -> (i32, i32, i32) {
    %c0_i32 = arith.constant 0 : i32
    %c0_i32_0 = arith.constant 0 : i32
    %c0_i32_1 = arith.constant 0 : i32
    return %arg1, %c0_i32, %c0_i32_0 : i32, i32, i32
  }
  func.func @transform_10(%arg0: i32, %arg1: i32) -> (i32, i32) {
    %c0_i32 = arith.constant 0 : i32
    %c0_i32_0 = arith.constant 0 : i32
    return %arg0, %c0_i32 : i32, i32
  }
}

</mosaic_0001>

<llo_original>
// kernel: tpu_custom_call.1
$region0: #{tpu_custom_call.1}
  #allocation0 [shape = 'u32[]', space=smem, size = 0x4, offset = 0x4, fixed_abs, tag = 'smem constant byte address 0x4 - core index']
  #allocation1 [shape = 'u32[72,128]{1,0:T(1,128)}', space=vmem, size = 0x9000, scoped, tag = 'internal scratch']
  #allocation2 [shape = 'f32[2,32]{1,0:T(2,128)}', space=vmem, size = 0x400, scoped, tag = 'scratch operand']
  #allocation3 [shape = 'f32[2,32]{1,0:T(2,128)}', space=vmem, size = 0x400, scoped, tag = 'scratch operand']
  %s0 = inlined_call_operand.vmem [shape: f32[2,32], index: 0, kind: input, shape index: {}]
  %s1 = inlined_call_operand.vmem [shape: f32[1,32], index: 1, kind: input, shape index: {}]
  %s2 = inlined_call_operand.vmem [shape: f32[32,32], index: 2, kind: input, shape index: {}]
  %s3 = inlined_call_operand.vmem [shape: bf16[2,32,96], index: 3, kind: input, shape index: {}]
  %s4 = inlined_call_operand.hbm [shape: f32[2,1,96], index: 4, kind: input, shape index: {}]
  %s5 = inlined_call_operand.vmem [shape: bf16[2,32,32], index: 5, kind: input, shape index: {}]
  %s6 = inlined_call_operand.hbm [shape: bf16[2,32,64], index: 6, kind: input, shape index: {}]
  %s7 = inlined_call_operand.hbm [shape: f32[2,1,64], index: 7, kind: input, shape index: {}]
  %s8 = inlined_call_operand.vmem [shape: bf16[2,64,32], index: 8, kind: input, shape index: {}]
  %s9 = inlined_call_operand.vmem [shape: f32[2,6,32], index: 9, kind: input, shape index: {}]
  %s10 = inlined_call_operand.hbm [shape: f32[2,32], index: 10, kind: output, shape index: {}]
  %s11 = sld [smem:[#allocation0]]
  $region93: #{tpu_custom_call.1} parent=0
    _
  %s13 = ssub.s32 1, %s11
  %s14 = scalar_select 0, %s13, %s11
  $region1: #{tpu_custom_call.1} parent=0
    #allocation4 [shape = 'u8[1024]{0}', space=vmem, size = 0x400, scoped, tag = 'input window, operand 4']
    #allocation5 [shape = 's32[2]{0}', space=sflag, size = 0x8, scoped, tag = 'scoped memory for tpu_custom_call.1']
    #allocation6 [shape = 's32[2]{0}', space=sflag, size = 0x8, scoped, tag = 'scoped memory for tpu_custom_call.1']
    #allocation7 [shape = 'u8[16384]{0}', space=vmem, size = 0x4000, scoped, tag = 'input window, operand 6']
    #allocation8 [shape = 's32[2]{0}', space=sflag, size = 0x8, scoped, tag = 'scoped memory for tpu_custom_call.1']
    #allocation9 [shape = 'u8[1024]{0}', space=vmem, size = 0x400, scoped, tag = 'input window, operand 7']
    #allocation10 [shape = 'u8[1024]{0}', space=vmem, size = 0x400, scoped, tag = 'output window, operand 0, single buffered']
    %15 = vsyncpa [#allocation5], 0
    %s16 = scalar_lea.sflag [#allocation5], 1
    %17 = vsyncpa %s16, 0
    %18 = vsyncpa [#allocation8], 0
    %s19 = scalar_lea.sflag [#allocation8], 1
    %20 = vsyncpa %s19, 0
    %21 = vsyncpa [#allocation6], 0
    loop: start=0, step=1, limit=4
    $region2: #{tpu_custom_call.1} parent=1 // loop_pre_header
      _
    $region3: #{tpu_custom_call.1} parent=1 // loop_header
      %s23 = sphi 0, %s27
      %p24 = scmp.ge.s32.totalorder %s23, 4
      %s30 = sphi 0, %s42
      %s31 = sphi 0, %s38
      %s32 = sphi 0, %s30
      %s33 = sphi 0, %s31
      %s34 = sphi 0, %s32
      %s35 = sphi 0, %s33
      %s45 = sphi 0, %s47
      %s48 = sphi 0, %s45
      %s49 = sphi 0, %s48
      %s65 = sphi 0, %s49
      %s69 = sphi 0, %s69
      %s71 = sphi 0, %s69
      %s72 = sphi 0, %s71
      %s86 = sphi 0, %s72
      %s90 = sphi 0, %s90
      %s92 = sphi 0, %s90
      %s93 = sphi 0, %s92
      %s107 = sphi 0, %s93
      %s113 = sphi 0, %s115
      %s116 = sphi 0, %s113
      %s117 = sphi 0, %s116
      %s133 = sphi 0, %s117
      %s139 = sphi 0, %s141
      %s142 = sphi 0, %s139
      %s143 = sphi 0, %s142
      %s159 = sphi 0, %s143
      %s165 = sphi 0, %s167
      %s168 = sphi 0, %s165
      %s169 = sphi 0, %s168
      %s185 = sphi 0, %s169
      %s191 = sphi 0, %s193
      %s194 = sphi 0, %s191
      %s195 = sphi 0, %s194
      %s211 = sphi 0, %s195
      %s217 = sphi 0, %s219
      %s220 = sphi 0, %s217
      %s221 = sphi 0, %s220
      %s237 = sphi 0, %s221
      %s243 = sphi 0, %s245
      %s246 = sphi 0, %s243
      %s247 = sphi 0, %s246
      %s263 = sphi 0, %s247
      %s269 = sphi 0, %s271
      %s272 = sphi 0, %s269
      %s273 = sphi 0, %s272
      %s289 = sphi 0, %s273
      %s295 = sphi 0, %s297
      %s298 = sphi 0, %s295
      %s299 = sphi 0, %s298
      %s315 = sphi 0, %s299
    $region4: #{tpu_custom_call.1} parent=1 // loop_header_branch
      %26 = sbr.rel (%p24) target = $region8
    $region5: #{tpu_custom_call.1} parent=1 // loop_body
      %s28 = ssub.s32 %s23, 1
      %s29 = ssub.s32 %s23, 2
      %s36 = sadd.s32 1, %s31
      %p37 = scmp.ge.s32.totalorder %s36, 2
      %s38 = scalar_select %p37, 0, %s36
      %s39 = sadd.s32 1, %s30
      %s40 = scalar_select %p37, %s39, %s30
      %p41 = scmp.ge.s32.totalorder %s40, 1
      %s42 = scalar_select %p41, 0, %s40
      %s43 = ssub.s32 %s30, %s42
      %p44 = scmp.eq.s32.totalorder %s43, 0
      %s46 = sadd.s32 %s45, 1
      %s47 = scalar_select %p44, %s45, %s46
      %p50 = pneg %p44
      %p51 = scmp.eq.s32.totalorder %s23, 1
      %p52 = por %p50, %p51
      %p53 = scmp.ne.s32.totalorder %s45, %s48
      %p54 = scmp.eq.s32.totalorder %s23, 0
      %p55 = por %p53, %p54
      %p56 = scmp.ne.s32.totalorder %s45, %s48
      %p57 = scmp.eq.s32.totalorder %s28, 1
      %p58 = por %p56, %p57
      %p59 = scmp.ne.s32.totalorder %s48, %s49
      %p60 = scmp.eq.s32.totalorder %s28, 0
      %p61 = por %p59, %p60
      %p62 = scmp.ne.s32.totalorder %s48, %s49
      %p63 = scmp.eq.s32.totalorder %s29, 1
      %p64 = por %p62, %p63
      %p66 = scmp.ne.s32.totalorder %s49, %s65
      %p67 = scmp.eq.s32.totalorder %s29, 0
      %p68 = por %p66, %p67
      %s70 = sadd.s32 %s69, 1
      %p73 = scmp.eq.s32.totalorder %s23, 1
      %p74 = scmp.ne.s32.totalorder %s69, %s71
      %p75 = scmp.eq.s32.totalorder %s23, 0
      %p76 = por %p74, %p75
      %p77 = scmp.ne.s32.totalorder %s69, %s71
      %p78 = scmp.eq.s32.totalorder %s28, 1
      %p79 = por %p77, %p78
      %p80 = scmp.ne.s32.totalorder %s71, %s72
      %p81 = scmp.eq.s32.totalorder %s28, 0
      %p82 = por %p80, %p81
      %p83 = scmp.ne.s32.totalorder %s71, %s72
      %p84 = scmp.eq.s32.totalorder %s29, 1
      %p85 = por %p83, %p84
      %p87 = scmp.ne.s32.totalorder %s72, %s86
      %p88 = scmp.eq.s32.totalorder %s29, 0
      %p89 = por %p87, %p88
      %s91 = sadd.s32 %s90, 1
      %p94 = scmp.eq.s32.totalorder %s23, 1
      %p95 = scmp.ne.s32.totalorder %s90, %s92
      %p96 = scmp.eq.s32.totalorder %s23, 0
      %p97 = por %p95, %p96
      %p98 = scmp.ne.s32.totalorder %s90, %s92
      %p99 = scmp.eq.s32.totalorder %s28, 1
      %p100 = por %p98, %p99
      %p101 = scmp.ne.s32.totalorder %s92, %s93
      %p102 = scmp.eq.s32.totalorder %s28, 0
      %p103 = por %p101, %p102
      %p104 = scmp.ne.s32.totalorder %s92, %s93
      %p105 = scmp.eq.s32.totalorder %s29, 1
      %p106 = por %p104, %p105
      %p108 = scmp.ne.s32.totalorder %s93, %s107
      %p109 = scmp.eq.s32.totalorder %s29, 0
      %p110 = por %p108, %p109
      %s111 = ssub.s32 %s31, %s38
      %p112 = scmp.eq.s32.totalorder %s111, 0
      %s114 = sadd.s32 %s113, 1
      %s115 = scalar_select %p112, %s113, %s114
      %p118 = pneg %p112
      %p119 = scmp.eq.s32.totalorder %s23, 1
      %p120 = por %p118, %p119
      %p121 = scmp.ne.s32.totalorder %s113, %s116
      %p122 = scmp.eq.s32.totalorder %s23, 0
      %p123 = por %p121, %p122
      %p124 = scmp.ne.s32.totalorder %s113, %s116
      %p125 = scmp.eq.s32.totalorder %s28, 1
      %p126 = por %p124, %p125
      %p127 = scmp.ne.s32.totalorder %s116, %s117
      %p128 = scmp.eq.s32.totalorder %s28, 0
      %p129 = por %p127, %p128
      %p130 = scmp.ne.s32.totalorder %s116, %s117
      %p131 = scmp.eq.s32.totalorder %s29, 1
      %p132 = por %p130, %p131
      %p134 = scmp.ne.s32.totalorder %s117, %s133
      %p135 = scmp.eq.s32.totalorder %s29, 0
      %p136 = por %p134, %p135
      %s137 = ssub.s32 %s31, %s38
      %p138 = scmp.eq.s32.totalorder %s137, 0
      %s140 = sadd.s32 %s139, 1
      %s141 = scalar_select %p138, %s139, %s140
      %p144 = pneg %p138
      %p145 = scmp.eq.s32.totalorder %s23, 1
      %p146 = por %p144, %p145
      %p147 = scmp.ne.s32.totalorder %s139, %s142
      %p148 = scmp.eq.s32.totalorder %s23, 0
      %p149 = por %p147, %p148
      %p150 = scmp.ne.s32.totalorder %s139, %s142
      %p151 = scmp.eq.s32.totalorder %s28, 1
      %p152 = por %p150, %p151
      %p153 = scmp.ne.s32.totalorder %s142, %s143
      %p154 = scmp.eq.s32.totalorder %s28, 0
      %p155 = por %p153, %p154
      %p156 = scmp.ne.s32.totalorder %s142, %s143
      %p157 = scmp.eq.s32.totalorder %s29, 1
      %p158 = por %p156, %p157
      %p160 = scmp.ne.s32.totalorder %s143, %s159
      %p161 = scmp.eq.s32.totalorder %s29, 0
      %p162 = por %p160, %p161
      %s163 = ssub.s32 %s31, %s38
      %p164 = scmp.eq.s32.totalorder %s163, 0
      %s166 = sadd.s32 %s165, 1
      %s167 = scalar_select %p164, %s165, %s166
      %p170 = pneg %p164
      %p171 = scmp.eq.s32.totalorder %s23, 1
      %p172 = por %p170, %p171
      %p173 = scmp.ne.s32.totalorder %s165, %s168
      %p174 = scmp.eq.s32.totalorder %s23, 0
      %p175 = por %p173, %p174
      %p176 = scmp.ne.s32.totalorder %s165, %s168
      %p177 = scmp.eq.s32.totalorder %s28, 1
      %p178 = por %p176, %p177
      %p179 = scmp.ne.s32.totalorder %s168, %s169
      %p180 = scmp.eq.s32.totalorder %s28, 0
      %p181 = por %p179, %p180
      %p182 = scmp.ne.s32.totalorder %s168, %s169
      %p183 = scmp.eq.s32.totalorder %s29, 1
      %p184 = por %p182, %p183
      %p186 = scmp.ne.s32.totalorder %s169, %s185
      %p187 = scmp.eq.s32.totalorder %s29, 0
      %p188 = por %p186, %p187
      %s189 = ssub.s32 %s31, %s38
      %p190 = scmp.eq.s32.totalorder %s189, 0
      %s192 = sadd.s32 %s191, 1
      %s193 = scalar_select %p190, %s191, %s192
      %p196 = pneg %p190
      %p197 = scmp.eq.s32.totalorder %s23, 1
      %p198 = por %p196, %p197
      %p199 = scmp.ne.s32.totalorder %s191, %s194
      %p200 = scmp.eq.s32.totalorder %s23, 0
      %p201 = por %p199, %p200
      %p202 = scmp.ne.s32.totalorder %s191, %s194
      %p203 = scmp.eq.s32.totalorder %s28, 1
      %p204 = por %p202, %p203
      %p205 = scmp.ne.s32.totalorder %s194, %s195
      %p206 = scmp.eq.s32.totalorder %s28, 0
      %p207 = por %p205, %p206
      %p208 = scmp.ne.s32.totalorder %s194, %s195
      %p209 = scmp.eq.s32.totalorder %s29, 1
      %p210 = por %p208, %p209
      %p212 = scmp.ne.s32.totalorder %s195, %s211
      %p213 = scmp.eq.s32.totalorder %s29, 0
      %p214 = por %p212, %p213
      %s215 = ssub.s32 %s31, %s38
      %p216 = scmp.eq.s32.totalorder %s215, 0
      %s218 = sadd.s32 %s217, 1
      %s219 = scalar_select %p216, %s217, %s218
      %p222 = pneg %p216
      %p223 = scmp.eq.s32.totalorder %s23, 1
      %p224 = por %p222, %p223
      %p225 = scmp.ne.s32.totalorder %s217, %s220
      %p226 = scmp.eq.s32.totalorder %s23, 0
      %p227 = por %p225, %p226
      %p228 = scmp.ne.s32.totalorder %s217, %s220
      %p229 = scmp.eq.s32.totalorder %s28, 1
      %p230 = por %p228, %p229
      %p231 = scmp.ne.s32.totalorder %s220, %s221
      %p232 = scmp.eq.s32.totalorder %s28, 0
      %p233 = por %p231, %p232
      %p234 = scmp.ne.s32.totalorder %s220, %s221
      %p235 = scmp.eq.s32.totalorder %s29, 1
      %p236 = por %p234, %p235
      %p238 = scmp.ne.s32.totalorder %s221, %s237
      %p239 = scmp.eq.s32.totalorder %s29, 0
      %p240 = por %p238, %p239
      %s241 = ssub.s32 %s31, %s38
      %p242 = scmp.eq.s32.totalorder %s241, 0
      %s244 = sadd.s32 %s243, 1
      %s245 = scalar_select %p242, %s243, %s244
      %p248 = pneg %p242
      %p249 = scmp.eq.s32.totalorder %s23, 1
      %p250 = por %p248, %p249
      %p251 = scmp.ne.s32.totalorder %s243, %s246
      %p252 = scmp.eq.s32.totalorder %s23, 0
      %p253 = por %p251, %p252
      %p254 = scmp.ne.s32.totalorder %s243, %s246
      %p255 = scmp.eq.s32.totalorder %s28, 1
      %p256 = por %p254, %p255
      %p257 = scmp.ne.s32.totalorder %s246, %s247
      %p258 = scmp.eq.s32.totalorder %s28, 0
      %p259 = por %p257, %p258
      %p260 = scmp.ne.s32.totalorder %s246, %s247
      %p261 = scmp.eq.s32.totalorder %s29, 1
      %p262 = por %p260, %p261
      %p264 = scmp.ne.s32.totalorder %s247, %s263
      %p265 = scmp.eq.s32.totalorder %s29, 0
      %p266 = por %p264, %p265
      %s267 = ssub.s32 %s31, %s38
      %p268 = scmp.eq.s32.totalorder %s267, 0
      %s270 = sadd.s32 %s269, 1
      %s271 = scalar_select %p268, %s269, %s270
      %p274 = pneg %p268
      %p275 = scmp.eq.s32.totalorder %s23, 1
      %p276 = por %p274, %p275
      %p277 = scmp.ne.s32.totalorder %s269, %s272
      %p278 = scmp.eq.s32.totalorder %s23, 0
      %p279 = por %p277, %p278
      %p280 = scmp.ne.s32.totalorder %s269, %s272
      %p281 = scmp.eq.s32.totalorder %s28, 1
      %p282 = por %p280, %p281
      %p283 = scmp.ne.s32.totalorder %s272, %s273
      %p284 = scmp.eq.s32.totalorder %s28, 0
      %p285 = por %p283, %p284
      %p286 = scmp.ne.s32.totalorder %s272, %s273
      %p287 = scmp.eq.s32.totalorder %s29, 1
      %p288 = por %p286, %p287
      %p290 = scmp.ne.s32.totalorder %s273, %s289
      %p291 = scmp.eq.s32.totalorder %s29, 0
      %p292 = por %p290, %p291
      %s293 = ssub.s32 %s30, %s42
      %p294 = scmp.eq.s32.totalorder %s293, 0
      %s296 = sadd.s32 %s295, 1
      %s297 = scalar_select %p294, %s295, %s296
      %p300 = pneg %p294
      %p301 = scmp.eq.s32.totalorder %s23, 1
      %p302 = por %p300, %p301
      %p303 = scmp.ne.s32.totalorder %s295, %s298
      %p304 = scmp.eq.s32.totalorder %s23, 0
      %p305 = por %p303, %p304
      %p306 = scmp.ne.s32.totalorder %s295, %s298
      %p307 = scmp.eq.s32.totalorder %s28, 1
      %p308 = por %p306, %p307
      %p309 = scmp.ne.s32.totalorder %s298, %s299
      %p310 = scmp.eq.s32.totalorder %s28, 0
      %p311 = por %p309, %p310
      %p312 = scmp.ne.s32.totalorder %s298, %s299
      %p313 = scmp.eq.s32.totalorder %s29, 1
      %p314 = por %p312, %p313
      %p316 = scmp.ne.s32.totalorder %s299, %s315
      %p317 = scmp.eq.s32.totalorder %s29, 0
      %p318 = por %p316, %p317
      %p319 = scmp.le.s32.totalorder 1, %s23
      %p320 = scmp.lt.s32.totalorder %s23, 3
      %p321 = pnand %p319, %p320
      %p322 = pneg %p321
      // Predicated region
      $region9: #{tpu_custom_call.1} parent=5 // pred_check
        _
      $region10: #{tpu_custom_call.1} parent=5 // pred_check_branch
        %324 = sbr.rel (%p321) target = $region12
      $region11: #{tpu_custom_call.1} parent=5 // pred_region
        %s325 = ssub.s32 %s23, 1
        // Predicated region
        $region13: #{tpu_custom_call.1} parent=11 // pred_check
          %p326 = pneg %p61
        $region14: #{tpu_custom_call.1} parent=11 // pred_check_branch
          %328 = sbr.rel (%p326) target = $region16
        $region15: #{tpu_custom_call.1} parent=11 // pred_region
          %p329 = scmp.lt.s32.totalorder %s32, 0
          %s330 = scalar_select %p329, %s32, 0
          %s331 = smul.addr %s330, 2
          %s332 = scalar_lea.vmem %s0, %s331
        $region16: #{tpu_custom_call.1} parent=11 // pred_fallthru
          _
        // Predicated region
        $region17: #{tpu_custom_call.1} parent=11 // pred_check
          %p333 = pneg %p82
        $region18: #{tpu_custom_call.1} parent=11 // pred_check_branch
          %335 = sbr.rel (%p333) target = $region20
        $region19: #{tpu_custom_call.1} parent=11 // pred_region
          _
        $region20: #{tpu_custom_call.1} parent=11 // pred_fallthru
          _
        // Predicated region
        $region21: #{tpu_custom_call.1} parent=11 // pred_check
          %p336 = pneg %p103
        $region22: #{tpu_custom_call.1} parent=11 // pred_check_branch
          %338 = sbr.rel (%p336) target = $region24
        $region23: #{tpu_custom_call.1} parent=11 // pred_region
          _
        $region24: #{tpu_custom_call.1} parent=11 // pred_fallthru
          _
      $region12: #{tpu_custom_call.1} parent=5 // pred_fallthru
        _
      %p339 = scmp.lt.s32.totalorder %s23, 2
      // Predicated region
      $region25: #{tpu_custom_call.1} parent=5 // pred_check
        %p340 = pneg %p339
      $region26: #{tpu_custom_call.1} parent=5 // pred_check_branch
        %342 = sbr.rel (%p340) target = $region28
      $region27: #{tpu_custom_call.1} parent=5 // pred_region
        // Predicated region
        $region29: #{tpu_custom_call.1} parent=27 // pred_check
          %p343 = pneg %p123
        $region30: #{tpu_custom_call.1} parent=27 // pred_check_branch
          %345 = sbr.rel (%p343) target = $region32
        $region31: #{tpu_custom_call.1} parent=27 // pred_region
          %p346 = scmp.lt.s32.totalorder %s31, 1
          %s347 = scalar_select %p346, %s31, 1
          %s348 = smul.addr %s347, 4
          %s349 = smul.addr %s348, 4
          %s350 = scalar_lea.vmem %s3, %s349
        $region32: #{tpu_custom_call.1} parent=27 // pred_fallthru
          _
        // Predicated region
        $region33: #{tpu_custom_call.1} parent=27 // pred_check
          %p351 = pneg %p149
        $region34: #{tpu_custom_call.1} parent=27 // pred_check_branch
          %353 = sbr.rel (%p351) target = $region36
        $region35: #{tpu_custom_call.1} parent=27 // pred_region
          %s354 = sand.u32 %s139, 1
          %s355 = scalar_lea.sflag [#allocation5], %s354
          %s356 = sand.u32 %s139, 1
          %s357 = scalar_lea.vmem [#allocation4], %s356
          %359 = vsyncadd %s355, 0
          %s360 = scalar_lea.hbm %s4, %s31
          %s362 = sshll.u32 %s360, 4
          %s363 = int_to_ptr.hbm [resolvable:$true] %s362
          %s364 = sshll.u32 %s357, 4
          %s365 = int_to_ptr.vmem [resolvable:$true] %s364
          %367 = dma.hbm_to_vmem [thread:$0]  %s363, 16, %s365, %s355
        $region36: #{tpu_custom_call.1} parent=27 // pred_fallthru
          _
        // Predicated region
        $region37: #{tpu_custom_call.1} parent=27 // pred_check
          %p368 = pneg %p175
        $region38: #{tpu_custom_call.1} parent=27 // pred_check_branch
          %370 = sbr.rel (%p368) target = $region40
        $region39: #{tpu_custom_call.1} parent=27 // pred_region
          %p371 = scmp.lt.s32.totalorder %s31, 1
          %s372 = scalar_select %p371, %s31, 1
          %s373 = smul.addr %s372, 4
          %s374 = smul.addr %s373, 4
          %s375 = scalar_lea.vmem %s5, %s374
        $region40: #{tpu_custom_call.1} parent=27 // pred_fallthru
          _
        // Predicated region
        $region41: #{tpu_custom_call.1} parent=27 // pred_check
          %p376 = pneg %p201
        $region42: #{tpu_custom_call.1} parent=27 // pred_check_branch
          %378 = sbr.rel (%p376) target = $region44
        $region43: #{tpu_custom_call.1} parent=27 // pred_region
          %s379 = sand.u32 %s23, 1
          %s380 = scalar_lea.sflag [#allocation8], %s379
          %s381 = sand.u32 %s191, 1
          %s382 = smul.addr %s381, 16
          %s383 = scalar_lea.vmem [#allocation7], %s382
          %385 = vsyncadd %s380, 0
          %s386 = smul.addr %s31, 4
          %s387 = smul.addr %s386, 4
          %s388 = scalar_lea.hbm %s6, %s387
          %s389 = sshll.u32 %s388, 4
          %s390 = int_to_ptr.hbm [resolvable:$true] %s389
          %s391 = sshll.u32 %s383, 4
          %s392 = int_to_ptr.vmem [resolvable:$true] %s391
          %397 = dma.hbm_to_vmem [thread:$0]  %s390, 256, %s392, %s380, 64, 64, 4
        $region44: #{tpu_custom_call.1} parent=27 // pred_fallthru
          _
        // Predicated region
        $region45: #{tpu_custom_call.1} parent=27 // pred_check
          %p398 = pneg %p227
        $region46: #{tpu_custom_call.1} parent=27 // pred_check_branch
          %400 = sbr.rel (%p398) target = $region48
        $region47: #{tpu_custom_call.1} parent=27 // pred_region
          %s401 = sand.u32 %s23, 1
          %s402 = scalar_lea.sflag [#allocation8], %s401
          %s403 = sand.u32 %s217, 1
          %s404 = scalar_lea.vmem [#allocation9], %s403
          %406 = vsyncadd %s402, 0
          %s407 = scalar_lea.hbm %s7, %s31
          %s409 = sshll.u32 %s407, 4
          %s410 = int_to_ptr.hbm [resolvable:$true] %s409
          %s411 = sshll.u32 %s404, 4
          %s412 = int_to_ptr.vmem [resolvable:$true] %s411
          %414 = dma.hbm_to_vmem [thread:$0]  %s410, 16, %s412, %s402
        $region48: #{tpu_custom_call.1} parent=27 // pred_fallthru
          _
        // Predicated region
        $region49: #{tpu_custom_call.1} parent=27 // pred_check
          %p415 = pneg %p253
        $region50: #{tpu_custom_call.1} parent=27 // pred_check_branch
          %417 = sbr.rel (%p415) target = $region52
        $region51: #{tpu_custom_call.1} parent=27 // pred_region
          %p418 = scmp.lt.s32.totalorder %s31, 1
          %s419 = scalar_select %p418, %s31, 1
          %s420 = smul.addr %s419, 8
          %s421 = smul.addr %s420, 4
          %s422 = scalar_lea.vmem %s8, %s421
        $region52: #{tpu_custom_call.1} parent=27 // pred_fallthru
          _
        // Predicated region
        $region53: #{tpu_custom_call.1} parent=27 // pred_check
          %p423 = pneg %p279
        $region54: #{tpu_custom_call.1} parent=27 // pred_check_branch
          %425 = sbr.rel (%p423) target = $region56
        $region55: #{tpu_custom_call.1} parent=27 // pred_region
          %p426 = scmp.lt.s32.totalorder %s31, 1
          %s427 = scalar_select %p426, %s31, 1
          %s428 = smul.addr %s427, 8
          %s429 = scalar_lea.vmem %s9, %s428
        $region56: #{tpu_custom_call.1} parent=27 // pred_fallthru
          _
      $region28: #{tpu_custom_call.1} parent=5 // pred_fallthru
        _
      %p430 = scmp.le.s32.totalorder 1, %s23
      %p431 = scmp.lt.s32.totalorder %s23, 3
      %p432 = pnand %p430, %p431
      %p433 = pneg %p432
      // Predicated region
      $region57: #{tpu_custom_call.1} parent=5 // pred_check
        _
      $region58: #{tpu_custom_call.1} parent=5 // pred_check_branch
        %435 = sbr.rel (%p432) target = $region60
      $region59: #{tpu_custom_call.1} parent=5 // pred_region
        %s436 = ssub.s32 %s23, 1
        %s437 = sand.u32 %s142, 1
        %s438 = scalar_lea.sflag [#allocation5], %s437
        %s439 = sand.u32 %s142, 1
        %s440 = scalar_lea.vmem [#allocation4], %s439
        // Predicated region
        $region61: #{tpu_custom_call.1} parent=59 // pred_check
          %p441 = pneg %p155
        $region62: #{tpu_custom_call.1} parent=59 // pred_check_branch
          %443 = sbr.rel (%p441) target = $region64
        $region63: #{tpu_custom_call.1} parent=59 // pred_region
          %445 = dma.done %s438, 16
        $region64: #{tpu_custom_call.1} parent=59 // pred_fallthru
          _
        %s446 = sand.u32 %s28, 1
        %s447 = scalar_lea.sflag [#allocation8], %s446
        %s448 = sand.u32 %s194, 1
        %s449 = smul.addr %s448, 16
        %s450 = scalar_lea.vmem [#allocation7], %s449
        // Predicated region
        $region65: #{tpu_custom_call.1} parent=59 // pred_check
          %p451 = pneg %p207
        $region66: #{tpu_custom_call.1} parent=59 // pred_check_branch
          %453 = sbr.rel (%p451) target = $region68
        $region67: #{tpu_custom_call.1} parent=59 // pred_region
          %455 = dma.done %s447, 256
        $region68: #{tpu_custom_call.1} parent=59 // pred_fallthru
          _
        %s456 = sand.u32 %s28, 1
        %s457 = scalar_lea.sflag [#allocation8], %s456
        %s458 = sand.u32 %s220, 1
        %s459 = scalar_lea.vmem [#allocation9], %s458
        // Predicated region
        $region69: #{tpu_custom_call.1} parent=59 // pred_check
          %p460 = pneg %p233
        $region70: #{tpu_custom_call.1} parent=59 // pred_check_branch
          %462 = sbr.rel (%p460) target = $region72
        $region71: #{tpu_custom_call.1} parent=59 // pred_region
          %464 = dma.done %s457, 16
        $region72: #{tpu_custom_call.1} parent=59 // pred_fallthru
          _
        %p465 = scmp.lt.s32.totalorder %s32, 0
        %s466 = scalar_select %p465, %s32, 0
        %s467 = smul.addr %s466, 2
        %s468 = scalar_lea.vmem %s0, %s467
        %p469 = pneg %p61
        %p470 = pneg %p58
        %p471 = pneg %p82
        %p472 = pneg %p79
        %p473 = pneg %p103
        %p474 = pneg %p100
        %p475 = scmp.lt.s32.totalorder %s33, 1
        %s476 = scalar_select %p475, %s33, 1
        %s477 = smul.addr %s476, 4
        %s478 = smul.addr %s477, 4
        %s479 = scalar_lea.vmem %s3, %s478
        %p480 = pneg %p129
        %p481 = pneg %p126
        %s482 = sand.u32 %s142, 1
        %s483 = scalar_lea.sflag [#allocation5], %s482
        %s484 = sand.u32 %s142, 1
        %s485 = scalar_lea.vmem [#allocation4], %s484
        %p486 = pneg %p155
        %p487 = pneg %p152
        %p488 = scmp.lt.s32.totalorder %s33, 1
        %s489 = scalar_select %p488, %s33, 1
        %s490 = smul.addr %s489, 4
        %s491 = smul.addr %s490, 4
        %s492 = scalar_lea.vmem %s5, %s491
        %p493 = pneg %p181
        %p494 = pneg %p178
        %s495 = sand.u32 %s28, 1
        %s496 = scalar_lea.sflag [#allocation8], %s495
        %s497 = sand.u32 %s194, 1
        %s498 = smul.addr %s497, 16
        %s499 = scalar_lea.vmem [#allocation7], %s498
        %p500 = pneg %p207
        %p501 = pneg %p204
        %s502 = sand.u32 %s28, 1
        %s503 = scalar_lea.sflag [#allocation8], %s502
        %s504 = sand.u32 %s220, 1
        %s505 = scalar_lea.vmem [#allocation9], %s504
        %p506 = pneg %p233
        %p507 = pneg %p230
        %p508 = scmp.lt.s32.totalorder %s33, 1
        %s509 = scalar_select %p508, %s33, 1
        %s510 = smul.addr %s509, 8
        %s511 = smul.addr %s510, 4
        %s512 = scalar_lea.vmem %s8, %s511
        %p513 = pneg %p259
        %p514 = pneg %p256
        %p515 = scmp.lt.s32.totalorder %s33, 1
        %s516 = scalar_select %p515, %s33, 1
        %s517 = smul.addr %s516, 8
        %s518 = scalar_lea.vmem %s9, %s517
        %p519 = pneg %p285
        %p520 = pneg %p282
        %p521 = pneg %p311
        %p522 = pneg %p308
        %p523 = scmp.lt.s32.totalorder %s32, 0
        %s524 = scalar_select %p523, %s32, 0
        %s525 = smul.addr %s524, 2
        %s526 = scalar_lea.vmem %s0, %s525
        %p527 = scmp.lt.s32.totalorder %s33, 1
        %s528 = scalar_select %p527, %s33, 1
        %s529 = smul.addr %s528, 4
        %s530 = smul.addr %s529, 4
        %s531 = scalar_lea.vmem %s3, %s530
        %p532 = scmp.lt.s32.totalorder %s33, 1
        %s533 = scalar_select %p532, %s33, 1
        %s534 = smul.addr %s533, 4
        %s535 = smul.addr %s534, 4
        %s536 = scalar_lea.vmem %s5, %s535
        %p537 = scmp.lt.s32.totalorder %s33, 1
        %s538 = scalar_select %p537, %s33, 1
        %s539 = smul.addr %s538, 8
        %s540 = smul.addr %s539, 4
        %s541 = scalar_lea.vmem %s8, %s540
        %p542 = scmp.lt.s32.totalorder %s33, 1
        %s543 = scalar_select %p542, %s33, 1
        %s544 = smul.addr %s543, 8
        %s545 = scalar_lea.vmem %s9, %s544
        %p547 = scmp.eq.s32.totalorder %s33, 0
        // Predicated region
        $region73: #{tpu_custom_call.1} parent=59 // pred_check
          %p548 = pneg %p547
        $region74: #{tpu_custom_call.1} parent=59 // pred_check_branch
          %550 = sbr.rel (%p548) target = $region76
        $region75: #{tpu_custom_call.1} parent=59 // pred_region
          %v551 = vld [vmem:[%s1] sm:$0x1]
          %v553 = vperm.slane %v551, 0
          %vm555 = vcmask 254976
          %556 = vst.msk [vmem:[#allocation2] sm:$0x3] %vm555, %v553
          %v557 = vld [vmem:[%s526] sm:$0x3]
          %558 = vst.msk [vmem:[#allocation3] sm:$0x3] %vm555, %v557
        $region76: #{tpu_custom_call.1} parent=59 // pred_fallthru
          _
        %v559 = vld [vmem:[#allocation2] sm:$0x3]
        %v560 = vld [vmem:[#allocation3] sm:$0x3]
        %v561 = vld [vmem:[%s531] sm:$0xf]
        %v562 = vld [vmem:[%s531 + $0x4] sm:$0xf]
        %v563 = vld [vmem:[%s531 + $0x8] sm:$0xf]
        %v564 = vld [vmem:[%s531 + $0xc] sm:$0xf]
        %v565 = vld [vmem:[%s440] sm:$0x1]
        %v566 = vld [vmem:[%s536] sm:$0xf]
        %v567 = vld [vmem:[%s536 + $0x4] sm:$0xf]
        %v568 = vld [vmem:[%s536 + $0x8] sm:$0xf]
        %v569 = vld [vmem:[%s536 + $0xc] sm:$0xf]
        %v570 = vld [vmem:[%s450] sm:$0xf]
        %v571 = vld [vmem:[%s450 + $0x4] sm:$0xf]
        %v572 = vld [vmem:[%s450 + $0x8] sm:$0xf]
        %v573 = vld [vmem:[%s450 + $0xc] sm:$0xf]
        %v574 = vld [vmem:[%s459] sm:$0x1]
        %v575 = vld [vmem:[%s541] sm:$0xf]
        %v576 = vld [vmem:[%s541 + $0x4] sm:$0xf]
        %v577 = vld [vmem:[%s541 + $0x8] sm:$0xf]
        %v578 = vld [vmem:[%s541 + $0xc] sm:$0xf]
        %v579 = vld [vmem:[%s541 + $0x10] sm:$0xf]
        %v580 = vld [vmem:[%s541 + $0x14] sm:$0xf]
        %v581 = vld [vmem:[%s541 + $0x18] sm:$0xf]
        %v582 = vld [vmem:[%s541 + $0x1c] sm:$0xf]
        %v583 = vld [vmem:[%s545] sm:$0x3f]
        %v584 = vpack.c.bf16 %v559, %v559
        %v586 = vperm.slane %v565, 0
        %v592 = vunpack.c.l.b16 %v561
        %v593 = vunpack.c.l.b16 %v562
        %v594 = vunpack.c.l.b16 %v563
        %v595 = vunpack.c.l.b16 %v564
        %v596 = vpack.c.b16 %v593, %v592
        %v597 = vpack.c.b16 %v595, %v594
        %vm600 = vcmask 261120
        %v602 = vsel %vm600, %v584, 0
        %604 = vmatpush.bf16.msra.mxu0 0
        %605 = vmatpush.bf16.msra.mxu0 0
        %606 = vmatpush.bf16.msra.mxu0 0
        %607 = vmatpush.bf16.msra.mxu0 0
        %608 = vmatpush.bf16.msra.mxu0 0
        %609 = vmatpush.bf16.msra.mxu0 0
        %610 = vmatpush.bf16.msra.mxu0 %v597
        %611 = vmatpush.bf16.msra.mxu0 %v596
        %612 = vmatmul.bf16.gmra.mxu0 %v602
        %v613 = vpop.f32.mrf.mxu0
        %v614 = vadd.f32 %v586, %v613
        %v615 = vpop.f32.mrf.mxu0
        %616 = vdwg.mxu0
        %v617 = vpack.c.bf16 %v560, %v560
        %v619 = vsel %vm600, %v617, 0
        %621 = vmatpush.bf16.msra.mxu0 0
        %622 = vmatpush.bf16.msra.mxu0 0
        %623 = vmatpush.bf16.msra.mxu0 0
        %624 = vmatpush.bf16.msra.mxu0 0
        %625 = vmatpush.bf16.msra.mxu0 0
        %626 = vmatpush.bf16.msra.mxu0 0
        %627 = vmatpush.bf16.msra.mxu0 %v597
        %628 = vmatpush.bf16.msra.mxu0 %v596
        %629 = vmatmul.bf16.gmra.mxu0 %v619
        %v630 = vpop.f32.mrf.mxu0
        %v631 = vadd.f32 %v586, %v630
        %v632 = vpop.f32.mrf.mxu0
        %633 = vdwg.mxu0
        %v634 = vsub.f32 %v614, %v631
        %v635 = vld [vmem:[%s2] sm:$0xff]
        %v636 = vld [vmem:[%s2 + $0x8] sm:$0xff]
        %v637 = vld [vmem:[%s2 + $0x10] sm:$0xff]
        %v638 = vld [vmem:[%s2 + $0x18] sm:$0xff]
        %640 = vrot.lane.b32.xlu0 %v634, 96
        %v641 = vpop.permute.xlu0 %640
        %v643 = vmul.f32 %v614, %v641
        %v645 = vsel %vm600, %v643, 0
        %647 = vmatpush.msra.mxu0 0.0
        %648 = vmatpush.msra.mxu0 0.0
        %649 = vmatpush.msra.mxu0 0.0
        %650 = vmatpush.msra.mxu0 0.0
        %651 = vmatpush.msra.mxu0 0.0
        %652 = vmatpush.msra.mxu0 0.0
        %653 = vmatpush.msra.mxu0 0.0
        %654 = vmatpush.msra.mxu0 0.0
        %655 = vmatpush.msra.mxu0 0.0
        %656 = vmatpush.msra.mxu0 0.0
        %657 = vmatpush.msra.mxu0 0.0
        %658 = vmatpush.msra.mxu0 0.0
        %659 = vmatpush.msra.mxu0 %v638
        %660 = vmatpush.msra.mxu0 %v637
        %661 = vmatpush.msra.mxu0 %v636
        %662 = vmatpush.msra.mxu0 %v635
        %663 = vmatmul.f32.gmra.mxu0 %v645
        %v664 = vpop.f32.mrf.mxu0
        %v665 = vadd.f32 0.0, %v664
        %666 = vdwg.mxu0
        %v667 = vmul.f32 %v631, %v641
        %v669 = vsel %vm600, %v667, 0
        %671 = vmatpush.msra.mxu0 0.0
        %672 = vmatpush.msra.mxu0 0.0
        %673 = vmatpush.msra.mxu0 0.0
        %674 = vmatpush.msra.mxu0 0.0
        %675 = vmatpush.msra.mxu0 0.0
        %676 = vmatpush.msra.mxu0 0.0
        %677 = vmatpush.msra.mxu0 0.0
        %678 = vmatpush.msra.mxu0 0.0
        %679 = vmatpush.msra.mxu0 0.0
        %680 = vmatpush.msra.mxu0 0.0
        %681 = vmatpush.msra.mxu0 0.0
        %682 = vmatpush.msra.mxu0 0.0
        %683 = vmatpush.msra.mxu0 %v638
        %684 = vmatpush.msra.mxu0 %v637
        %685 = vmatpush.msra.mxu0 %v636
        %686 = vmatpush.msra.mxu0 %v635
        %687 = vmatmul.f32.gmra.mxu0 %v669
        %v688 = vpop.f32.mrf.mxu0
        %v689 = vadd.f32 0.0, %v688
        %690 = vdwg.mxu0
        %v691 = vmul.f32 %v665, 0.35355338
        %v692 = vxor.u32 %v691, 2147483648
        %v693 = vmul.f32 %v692, 1.442695
        %v694 = vpow.pop %v693
        %v695 = vadd.f32 %v694, 1.0
        %v696 = vrcp.pop %v695
        %v697 = vmul.f32 %v695, %v696
        %v698 = vsub.f32 1.0, %v697
        %v699 = vmul.f32 %v696, %v698
        %v700 = vadd.f32 %v696, %v699
        %vm701 = vweird.f32 %v695
        %vm702 = vweird.f32 %v696
        %vm703 = vmor %vm701, %vm702
        %v704 = vsel %vm703, %v696, %v700
        %v705 = vand.u32 2147483647, %v695
        %vm706 = vcmp.eq.f32.partialorder %v705, 8.507059e+37
        %v707 = vand.u32 %v695, 2147483648
        %v708 = vor.u32 1.1754944e-38, %v707
        %v709 = vsel %vm706, %v708, %v704
        %v710 = vmul.f32 1.0, %v709
        %v711 = vmul.f32 %v689, 0.35355338
        %v712 = vxor.u32 %v711, 2147483648
        %v713 = vmul.f32 %v712, 1.442695
        %v714 = vpow.pop %v713
        %v715 = vadd.f32 %v714, 1.0
        %v716 = vrcp.pop %v715
        %v717 = vmul.f32 %v715, %v716
        %v718 = vsub.f32 1.0, %v717
        %v719 = vmul.f32 %v716, %v718
        %v720 = vadd.f32 %v716, %v719
        %vm721 = vweird.f32 %v715
        %vm722 = vweird.f32 %v716
        %vm723 = vmor %vm721, %vm722
        %v724 = vsel %vm723, %v716, %v720
        %v725 = vand.u32 2147483647, %v715
        %vm726 = vcmp.eq.f32.partialorder %v725, 8.507059e+37
        %v727 = vand.u32 %v715, 2147483648
        %v728 = vor.u32 1.1754944e-38, %v727
        %v729 = vsel %vm726, %v728, %v724
        %v730 = vmul.f32 1.0, %v729
        %731 = vrot.lane.b32.xlu0 %v634, 64
        %v732 = vpop.permute.xlu0 %731
        %v734 = vmul.f32 %v710, %v732
        %736 = vrot.lane.b32.xlu0 %v734, 64
        %v737 = vpop.permute.xlu0 %736
        %v739 = vadd.f32 %v631, %v737
        %v740 = vmul.f32 %v730, %v732
        %742 = vrot.lane.b32.xlu0 %v740, 64
        %v743 = vpop.permute.xlu0 %742
        %v745 = vadd.f32 %v631, %v743
        %v746 = vpack.c.bf16 %v739, %v739
        %v747 = vperm.slane %v583, 0
        %749 = vrot.lane.b32.xlu0 %v746, 64
        %v750 = vpop.permute.xlu0 %749
        %v755 = vunpack.c.l.b16 %v566
        %v756 = vunpack.c.l.b16 %v567
        %v757 = vunpack.c.l.b16 %v568
        %v758 = vunpack.c.l.b16 %v569
        %v759 = vpack.c.b16 %v756, %v755
        %v760 = vpack.c.b16 %v758, %v757
        %v764 = vsel %vm600, %v750, 0
        %766 = vmatpush.bf16.msra.mxu0 0
        %767 = vmatpush.bf16.msra.mxu0 0
        %768 = vmatpush.bf16.msra.mxu0 0
        %769 = vmatpush.bf16.msra.mxu0 0
        %770 = vmatpush.bf16.msra.mxu0 0
        %771 = vmatpush.bf16.msra.mxu0 0
        %772 = vmatpush.bf16.msra.mxu0 %v760
        %773 = vmatpush.bf16.msra.mxu0 %v759
        %774 = vmatmul.bf16.gmra.mxu0 %v764
        %v775 = vpop.f32.mrf.mxu0
        %v776 = vadd.f32 %v747, %v775
        %v777 = vpop.f32.mrf.mxu0
        %778 = vdwg.mxu0
        %v779 = vpack.c.bf16 %v745, %v745
        %781 = vrot.lane.b32.xlu0 %v779, 64
        %v782 = vpop.permute.xlu0 %781
        %v784 = vsel %vm600, %v782, 0
        %786 = vmatpush.bf16.msra.mxu0 0
        %787 = vmatpush.bf16.msra.mxu0 0
        %788 = vmatpush.bf16.msra.mxu0 0
        %789 = vmatpush.bf16.msra.mxu0 0
        %790 = vmatpush.bf16.msra.mxu0 0
        %791 = vmatpush.bf16.msra.mxu0 0
        %792 = vmatpush.bf16.msra.mxu0 %v760
        %793 = vmatpush.bf16.msra.mxu0 %v759
        %794 = vmatmul.bf16.gmra.mxu0 %v784
        %v795 = vpop.f32.mrf.mxu0
        %v796 = vadd.f32 %v747, %v795
        %v797 = vpop.f32.mrf.mxu0
        %798 = vdwg.mxu0
        %v799 = vadd.f32 %v559, %v776
        %vm800 = vcmask 254976
        %v801 = vsel %vm800, %v799, 0.0
        %802 = vadd.xlane.f32.xlu0 %v801
        %v803 = vpop.xlane.xlu0 %802
        %v804 = vrcp.pop 32.0
        %v805 = vmul.f32 32.0, %v804
        %v806 = vsub.f32 1.0, %v805
        %v807 = vmul.f32 %v804, %v806
        %v808 = vadd.f32 %v804, %v807
        %vm809 = vweird.f32 %v804
        %v810 = vsel %vm809, %v804, %v808
        %v811 = vmul.f32 %v803, %v810
        %v812 = vsub.f32 %v799, %v811
        %v813 = vmul.f32 %v812, %v812
        %v814 = vsel %vm800, %v813, 0.0
        %815 = vadd.xlane.f32.xlu0 %v814
        %v816 = vpop.xlane.xlu0 %815
        %v817 = vmul.f32 %v816, %v810
        %v818 = vadd.f32 %v817, 1e-05
        %v819 = vrsqrt.pop %v818
        %v820 = vmul.f32 %v819, %v818
        %v821 = vmul.f32 %v820, %v819
        %v822 = vmul.f32 0.5, %v821
        %v823 = vsub.f32 1.5, %v822
        %v824 = vmul.f32 %v819, %v823
        %vm825 = vweird.f32 %v818
        %vm826 = vweird.f32 %v819
        %vm827 = vmor %vm825, %vm826
        %v828 = vsel %vm827, %v819, %v824
        %v829 = vmul.f32 %v812, %v828
        %v830 = vperm.slane %v583, 1
        %v831 = vmul.f32 %v829, %v830
        %v832 = vperm.slane %v583, 2
        %v833 = vadd.f32 %v831, %v832
        %v834 = vadd.f32 %v560, %v796
        %v835 = vsel %vm800, %v834, 0.0
        %836 = vadd.xlane.f32.xlu0 %v835
        %v837 = vpop.xlane.xlu0 %836
        %v838 = vmul.f32 %v837, %v810
        %v839 = vsub.f32 %v834, %v838
        %v840 = vmul.f32 %v839, %v839
        %v841 = vsel %vm800, %v840, 0.0
        %842 = vadd.xlane.f32.xlu0 %v841
        %v843 = vpop.xlane.xlu0 %842
        %v844 = vmul.f32 %v843, %v810
        %v845 = vadd.f32 %v844, 1e-05
        %v846 = vrsqrt.pop %v845
        %v847 = vmul.f32 %v846, %v845
        %v848 = vmul.f32 %v847, %v846
        %v849 = vmul.f32 0.5, %v848
        %v850 = vsub.f32 1.5, %v849
        %v851 = vmul.f32 %v846, %v850
        %vm852 = vweird.f32 %v845
        %vm853 = vweird.f32 %v846
        %vm854 = vmor %vm852, %vm853
        %v855 = vsel %vm854, %v846, %v851
        %v856 = vmul.f32 %v839, %v855
        %v857 = vmul.f32 %v856, %v830
        %v858 = vadd.f32 %v857, %v832
        %v859 = vpack.c.bf16 %v833, %v833
        %v861 = vperm.slane %v574, 0
        %v867 = vunpack.c.l.b16 %v570
        %v868 = vunpack.c.l.b16 %v571
        %v869 = vunpack.c.l.b16 %v572
        %v870 = vunpack.c.l.b16 %v573
        %v871 = vpack.c.b16 %v868, %v867
        %v872 = vpack.c.b16 %v870, %v869
        %v876 = vsel %vm600, %v859, 0
        %878 = vmatpush.bf16.msra.mxu0 0
        %879 = vmatpush.bf16.msra.mxu0 0
        %880 = vmatpush.bf16.msra.mxu0 0
        %881 = vmatpush.bf16.msra.mxu0 0
        %882 = vmatpush.bf16.msra.mxu0 0
        %883 = vmatpush.bf16.msra.mxu0 0
        %884 = vmatpush.bf16.msra.mxu0 %v872
        %885 = vmatpush.bf16.msra.mxu0 %v871
        %886 = vmatmul.bf16.gmra.mxu0 %v876
        %v887 = vpop.f32.mrf.mxu0
        %v888 = vadd.f32 %v861, %v887
        %v889 = vpop.f32.mrf.mxu0
        %890 = vdwg.mxu0
        %v891 = vmax.f32 %v888, 0.0
        %v892 = vpack.c.bf16 %v858, %v858
        %v894 = vsel %vm600, %v892, 0
        %896 = vmatpush.bf16.msra.mxu0 0
        %897 = vmatpush.bf16.msra.mxu0 0
        %898 = vmatpush.bf16.msra.mxu0 0
        %899 = vmatpush.bf16.msra.mxu0 0
        %900 = vmatpush.bf16.msra.mxu0 0
        %901 = vmatpush.bf16.msra.mxu0 0
        %902 = vmatpush.bf16.msra.mxu0 %v872
        %903 = vmatpush.bf16.msra.mxu0 %v871
        %904 = vmatmul.bf16.gmra.mxu0 %v894
        %v905 = vpop.f32.mrf.mxu0
        %v906 = vadd.f32 %v861, %v905
        %v907 = vpop.f32.mrf.mxu0
        %908 = vdwg.mxu0
        %v909 = vmax.f32 %v906, 0.0
        %v910 = vpack.c.bf16 %v891, %v891
        %v911 = vperm.slane %v583, 3
        %v920 = vunpack.c.l.b16 %v575
        %v921 = vunpack.c.l.b16 %v576
        %v922 = vunpack.c.l.b16 %v577
        %v923 = vunpack.c.l.b16 %v578
        %v924 = vunpack.c.l.b16 %v579
        %v925 = vunpack.c.l.b16 %v580
        %v926 = vunpack.c.l.b16 %v581
        %v927 = vunpack.c.l.b16 %v582
        %v928 = vpack.c.b16 %v921, %v920
        %v929 = vpack.c.b16 %v923, %v922
        %v930 = vpack.c.b16 %v925, %v924
        %v931 = vpack.c.b16 %v927, %v926
        %vm936 = vcmask 523264
        %v938 = vsel %vm936, %v910, 0
        %940 = vmatpush.bf16.msra.mxu0 0
        %941 = vmatpush.bf16.msra.mxu0 0
        %942 = vmatpush.bf16.msra.mxu0 0
        %943 = vmatpush.bf16.msra.mxu0 0
        %944 = vmatpush.bf16.msra.mxu0 %v931
        %945 = vmatpush.bf16.msra.mxu0 %v930
        %946 = vmatpush.bf16.msra.mxu0 %v929
        %947 = vmatpush.bf16.msra.mxu0 %v928
        %948 = vmatmul.bf16.gmra.mxu0 %v938
        %v949 = vpop.f32.mrf.mxu0
        %v950 = vadd.f32 %v911, %v949
        %v951 = vpop.f32.mrf.mxu0
        %952 = vdwg.mxu0
        %v953 = vpack.c.bf16 %v909, %v909
        %v955 = vsel %vm936, %v953, 0
        %957 = vmatpush.bf16.msra.mxu0 0
        %958 = vmatpush.bf16.msra.mxu0 0
        %959 = vmatpush.bf16.msra.mxu0 0
        %960 = vmatpush.bf16.msra.mxu0 0
        %961 = vmatpush.bf16.msra.mxu0 %v931
        %962 = vmatpush.bf16.msra.mxu0 %v930
        %963 = vmatpush.bf16.msra.mxu0 %v929
        %964 = vmatpush.bf16.msra.mxu0 %v928
        %965 = vmatmul.bf16.gmra.mxu0 %v955
        %v966 = vpop.f32.mrf.mxu0
        %v967 = vadd.f32 %v911, %v966
        %v968 = vpop.f32.mrf.mxu0
        %969 = vdwg.mxu0
        %v970 = vadd.f32 %v833, %v950
        %v971 = vsel %vm800, %v970, 0.0
        %972 = vadd.xlane.f32.xlu0 %v971
        %v973 = vpop.xlane.xlu0 %972
        %v974 = vmul.f32 %v973, %v810
        %v975 = vsub.f32 %v970, %v974
        %v976 = vmul.f32 %v975, %v975
        %v977 = vsel %vm800, %v976, 0.0
        %978 = vadd.xlane.f32.xlu0 %v977
        %v979 = vpop.xlane.xlu0 %978
        %v980 = vmul.f32 %v979, %v810
        %v981 = vadd.f32 %v980, 1e-05
        %v982 = vrsqrt.pop %v981
        %v983 = vmul.f32 %v982, %v981
        %v984 = vmul.f32 %v983, %v982
        %v985 = vmul.f32 0.5, %v984
        %v986 = vsub.f32 1.5, %v985
        %v987 = vmul.f32 %v982, %v986
        %vm988 = vweird.f32 %v981
        %vm989 = vweird.f32 %v982
        %vm990 = vmor %vm988, %vm989
        %v991 = vsel %vm990, %v982, %v987
        %v992 = vmul.f32 %v975, %v991
        %v993 = vperm.slane %v583, 4
        %v994 = vmul.f32 %v992, %v993
        %v995 = vperm.slane %v583, 5
        %v996 = vadd.f32 %v994, %v995
        %v997 = vadd.f32 %v858, %v967
        %v998 = vsel %vm800, %v997, 0.0
        %999 = vadd.xlane.f32.xlu0 %v998
        %v1000 = vpop.xlane.xlu0 %999
        %v1001 = vmul.f32 %v1000, %v810
        %v1002 = vsub.f32 %v997, %v1001
        %v1003 = vmul.f32 %v1002, %v1002
        %v1004 = vsel %vm800, %v1003, 0.0
        %1005 = vadd.xlane.f32.xlu0 %v1004
        %v1006 = vpop.xlane.xlu0 %1005
        %v1007 = vmul.f32 %v1006, %v810
        %v1008 = vadd.f32 %v1007, 1e-05
        %v1009 = vrsqrt.pop %v1008
        %v1010 = vmul.f32 %v1009, %v1008
        %v1011 = vmul.f32 %v1010, %v1009
        %v1012 = vmul.f32 0.5, %v1011
        %v1013 = vsub.f32 1.5, %v1012
        %v1014 = vmul.f32 %v1009, %v1013
        %vm1015 = vweird.f32 %v1008
        %vm1016 = vweird.f32 %v1009
        %vm1017 = vmor %vm1015, %vm1016
        %v1018 = vsel %vm1017, %v1009, %v1014
        %v1019 = vmul.f32 %v1002, %v1018
        %v1020 = vmul.f32 %v1019, %v993
        %v1021 = vadd.f32 %v1020, %v995
        %1022 = vst.msk [vmem:[#allocation2] sm:$0x3] %vm800, %v996
        %1023 = vst.msk [vmem:[#allocation3] sm:$0x3] %vm800, %v1021
        %p1024 = scmp.eq.s32.totalorder %s33, 1
        // Predicated region
        $region77: #{tpu_custom_call.1} parent=59 // pred_check
          %p1025 = pneg %p1024
        $region78: #{tpu_custom_call.1} parent=59 // pred_check_branch
          %1027 = sbr.rel (%p1025) target = $region80
        $region79: #{tpu_custom_call.1} parent=59 // pred_region
          %1028 = vst.msk [vmem:[#allocation10] sm:$0x3] %vm800, %v996
        $region80: #{tpu_custom_call.1} parent=59 // pred_fallthru
          _
        // Predicated region
        $region81: #{tpu_custom_call.1} parent=59 // pred_check
          %p1029 = pneg %p308
        $region82: #{tpu_custom_call.1} parent=59 // pred_check_branch
          %1031 = sbr.rel (%p1029) target = $region84
        $region83: #{tpu_custom_call.1} parent=59 // pred_region
          %1033 = vsyncadd [#allocation6], 0
          %s1034 = smul.addr %s32, 2
          %s1035 = scalar_lea.hbm %s10, %s1034
          %s1037 = sshll.u32 [#allocation10], 4
          %s1038 = int_to_ptr.vmem [resolvable:$true] %s1037
          %s1039 = sshll.u32 %s1035, 4
          %s1040 = int_to_ptr.hbm [resolvable:$true] %s1039
          %1042 = dma.vmem_to_hbm [thread:$0]  %s1038, 32, %s1040, [#allocation6]
        $region84: #{tpu_custom_call.1} parent=59 // pred_fallthru
          _
        // Predicated region
        $region85: #{tpu_custom_call.1} parent=59 // pred_check
          %p1043 = pneg %p308
        $region86: #{tpu_custom_call.1} parent=59 // pred_check_branch
          %1045 = sbr.rel (%p1043) target = $region88
        $region87: #{tpu_custom_call.1} parent=59 // pred_region
          %1047 = dma.done [#allocation6], 32
        $region88: #{tpu_custom_call.1} parent=59 // pred_fallthru
          _
      $region60: #{tpu_custom_call.1} parent=5 // pred_fallthru
        _
      %p1048 = scmp.le.s32.totalorder 2, %s23
      // Predicated region
      $region89: #{tpu_custom_call.1} parent=5 // pred_check
        %p1049 = pneg %p1048
      $region90: #{tpu_custom_call.1} parent=5 // pred_check_branch
        %1051 = sbr.rel (%p1049) target = $region92
      $region91: #{tpu_custom_call.1} parent=5 // pred_region
        %s1052 = ssub.s32 %s23, 2
      $region92: #{tpu_custom_call.1} parent=5 // pred_fallthru
        _
    $region6: #{tpu_custom_call.1} parent=1 // loop_footer
      %s27 = sadd.s32 1, %s23
    $region7: #{tpu_custom_call.1} parent=1 // loop_footer_branch
      %22 = sbr.rel target = $region3
    $region8: #{tpu_custom_call.1} parent=1 // loop_exit
      _
    %1053 = vsyncpa [#allocation5], 1
    %s1054 = scalar_lea.sflag [#allocation5], 1
    %1055 = vsyncpa %s1054, 1
    %1056 = vsyncpa [#allocation8], 1
    %s1057 = scalar_lea.sflag [#allocation8], 1
    %1058 = vsyncpa %s1057, 1
    %1059 = vsyncpa [#allocation6], 1
    %s1060 = scalar_lea.sflag [#allocation6], 1
    %1061 = vsyncpa %s1060, 1

</llo_original>
